<compile_context>
chip_gen: v5e
topology: v5e:2x2
jax: 0.10.0
libtpu: 0.0.40
codegen_flags: <defaults>
</compile_context>

<pallas_src>
import jax
import jax.numpy as jnp
from jax import lax
from jax.experimental import pallas as pl
from jax.experimental.pallas import tpu as pltpu
import numpy as np

LEAV_IDX = [11, 15, 22, 23, 26, 27, 29, 30, 31, 39, 42, 52, 55, 58, 61, 64, 67, 69, 72,
            74, 75, 76, 80, 82]
N_FEAT = 24


def _leaky(v):
    # torch.nn.LeakyReLU(0.1)
    return jnp.where(v >= 0, v, 0.1 * v)


def _round_up(n, m):
    return ((n + m - 1) // m) * m


# ----------------------------------------------------------------------------
# Fused kernel: all LSTM layers (both directions) + attention/fc head.
# ----------------------------------------------------------------------------
def make_fused_kernel(n_layers, T, Bp, H):
    H2, H4, H6, H8 = 2 * H, 4 * H, 6 * H, 8 * H
    dins = [N_FEAT] + [H2] * (n_layers - 1)
    # Row offset of each layer's [Wih ; Whh_blockdiag ; bias] block in the LSTM slab.
    offs, r = [], 0
    for din in dins:
        offs.append(r)
        r += _round_up(din + H2 + 1, 8)

    # Head-slab row offsets (every section starts on an 8-row boundary).
    R_D1W, R_D1B = 0, N_FEAT
    R_D2W, R_D2B = N_FEAT + 8, 2 * N_FEAT + 8
    R_FCW = R_D2B + 8
    R_FCB = R_FCW + H2
    R_W = R_FCB + 8

    def kernel(xs_ref, conn_ref, lstm_ref, head_ref, out_ref, seq_scr):
        # Constant lane masks, hoisted (reused every step / layer).
        lane8 = lax.broadcasted_iota(jnp.int32, (Bp, H8), 1)
        if (H & (H - 1)) == 0:
            fwd_gate_mask = (lane8 & H) == 0            # (lane % 2H) < H, power-of-2 fast path
        else:
            fwd_gate_mask = (lane8 % H2) < H
        lane2 = lax.broadcasted_iota(jnp.int32, (Bp, H2), 1)
        fwd_h_mask = lane2 < H

        h_final = None
        h_t0 = None
        for layer in range(n_layers):
            base, din = offs[layer], dins[layer]
            wih = lstm_ref[base:base + din, :]                      # (Din, 8H)  interleaved gates
            whh = lstm_ref[base + din:base + din + H2, :]           # (2H, 8H)   block-diagonal
            b = lstm_ref[base + din + H2:base + din + H2 + 1, :]    # (1, 8H)    bih + bhh, both dirs

            # Hoisted input projection: all timesteps, both directions, ONE matmul.
            xin = xs_ref[...] if layer == 0 else seq_scr[...]
            gx = jnp.dot(xin, wih, preferred_element_type=jnp.float32) + b   # (T*Bp, 8H)

            h_cat = jnp.zeros((Bp, H2), jnp.float32)    # [h_fwd | h_bwd]
            c_cat = jnp.zeros((Bp, H2), jnp.float32)    # [c_fwd | c_bwd]
            last_layer = layer == n_layers - 1

            # Fully unrolled time loop (T static): both directions advance together;
            # only the (Bp,2H)@(2H,8H) recurrent matmul sits on the serial path.
            for t in range(T):
                gx_t = gx[t * Bp:(t + 1) * Bp, :]
                gx_r = gx[(T - 1 - t) * Bp:(T - t) * Bp, :]
                gx_step = jnp.where(fwd_gate_mask, gx_t, gx_r)      # fwd cols <- x_t, bwd <- x_{T-1-t}
                if t == 0:
                    gates = gx_step                                  # h == 0: recurrent term vanishes
                else:
                    gates = gx_step + jnp.dot(h_cat, whh, preferred_element_type=jnp.float32)
                s = jax.nn.sigmoid(gates)                            # one EUP pass covers i, f, o (both dirs)
                g_cat = jnp.tanh(gates[:, H4:H6])                    # [g_f | g_b]
                c_cat = s[:, H2:H4] * c_cat + s[:, :H2] * g_cat      # fused (Bp,2H) cell update
                h_cat = s[:, H6:] * jnp.tanh(c_cat)                  # fused (Bp,2H) hidden update
                if t == 0:
                    h_t0 = h_cat                                     # bwd half = y_bwd at time T-1
                if not last_layer:
                    # y_fwd[t] and y_bwd[T-1-t] into the merged (T*Bp,2H) sequence scratch
                    seq_scr[t * Bp:(t + 1) * Bp, :H] = h_cat[:, :H]
                    seq_scr[(T - 1 - t) * Bp:(T - t) * Bp, H:] = h_cat[:, H:]
            h_final = h_cat

        # ------------------------------ head -------------------------------
        # Data-independent of the recurrence; kept straight-line so the LLO
        # scheduler interleaves it under the recurrence's latency slack.
        conn = conn_ref[...]                                         # (Bp, 24)
        att = _leaky(conn)
        att = _leaky(jnp.dot(att, head_ref[R_D1W:R_D1W + N_FEAT, :],
                             preferred_element_type=jnp.float32)
                     + head_ref[R_D1B:R_D1B + 1, :])
        att = jax.nn.sigmoid(jnp.dot(att, head_ref[R_D2W:R_D2W + N_FEAT, :],
                                     preferred_element_type=jnp.float32)
                             + head_ref[R_D2B:R_D2B + 1, :])
        # outs[-1] = [y_fwd_{T-1} | y_bwd_{T-1}]: one vselect, then one (Bp,2H)@(2H,24) matmul.
        h_last = jnp.where(fwd_h_mask, h_final, h_t0)
        out_fc = (jnp.dot(_leaky(h_last), head_ref[R_FCW:R_FCW + H2, :],
                          preferred_element_type=jnp.float32)
                  + head_ref[R_FCB:R_FCB + 1, :])
        mix = jax.nn.sigmoid(head_ref[R_W:R_W + 1, 0:1])             # (1,1) mix factor
        out_ref[...] = mix * conn * att + out_fc * (1.0 - mix)

    return kernel


# ----------------------------------------------------------------------------
# Parameter init (PyTorch-default-style uniform).
# ----------------------------------------------------------------------------
def init_params(key, n_hiddens, n_layers):
    H = n_hiddens

    def uni(k, shape, fan):
        bound = 1.0 / (fan ** 0.5)
        return jax.random.uniform(k, shape, jnp.float32, -bound, bound)

    keys = iter(jax.random.split(key, 8 * n_layers * 2 + 16))
    params = {"lstm": []}
    for layer in range(n_layers):
        din = N_FEAT if layer == 0 else 2 * H
        dirs = []
        for _ in range(2):  # forward, backward
            wih = uni(next(keys), (4 * H, din), H)        # torch weight_ih_l{k}, gates [i;f;g;o]
            whh = uni(next(keys), (4 * H, H), H)          # torch weight_hh_l{k}
            bih = uni(next(keys), (4 * H,), H)
            bhh = uni(next(keys), (4 * H,), H)
            dirs.append(dict(wih_t=wih.T, whh_t=whh.T,
                             b=(bih + bhh).reshape(1, 4 * H)))
        params["lstm"].append(dirs)
    params["fc_w_t"] = uni(next(keys), (N_FEAT, 2 * H), 2 * H).T   # Linear(2H, 24) -> (2H, 24)
    params["fc_b"] = uni(next(keys), (1, N_FEAT), 2 * H)
    params["d1_w_t"] = uni(next(keys), (12, N_FEAT), N_FEAT).T     # Linear(24, 12) -> (24, 12)
    params["d1_b"] = uni(next(keys), (1, 12), N_FEAT)
    params["d2_w_t"] = uni(next(keys), (N_FEAT, 12), 12).T         # Linear(12, 24) -> (12, 24)
    params["d2_b"] = uni(next(keys), (1, N_FEAT), 12)
    params["w"] = jnp.array([[-0.01]], jnp.float32)                # self.w
    return params


# ----------------------------------------------------------------------------
# Kernel-side packing: one LSTM slab + one head slab.
# ----------------------------------------------------------------------------
def pack_kernel_params(params, n_hiddens, n_layers):
    H = n_hiddens
    H2, H4 = 2 * H, 4 * H

    def interleave(wf, wb):
        # wf, wb: (rows, 4H), column blocks [i|f|g|o] ->
        # (rows, 8H) with columns [i_f i_b f_f f_b g_f g_b o_f o_b]
        cols = []
        for k in range(4):
            cols.append(wf[:, k * H:(k + 1) * H])
            cols.append(wb[:, k * H:(k + 1) * H])
        return jnp.concatenate(cols, axis=1)

    # One slab for all LSTM layers; per layer rows = [Wih ; Whh_blockdiag ; bias] (8-aligned).
    blocks = []
    for layer in range(n_layers):
        fwd, bwd = params["lstm"][layer]
        wih = interleave(fwd["wih_t"], bwd["wih_t"])                        # (Din, 8H)
        zeros = jnp.zeros((H, H4), jnp.float32)                             # exact-zero off-diagonal
        whh_bd = interleave(jnp.concatenate([fwd["whh_t"], zeros], axis=0),
                            jnp.concatenate([zeros, bwd["whh_t"]], axis=0))  # (2H, 8H)
        bias = interleave(fwd["b"], bwd["b"])                               # (1, 8H)
        blk = jnp.concatenate([wih, whh_bd, bias], axis=0)
        pad = _round_up(blk.shape[0], 8) - blk.shape[0]
        blocks.append(jnp.pad(blk, ((0, pad), (0, 0))))
    lstm_slab = jnp.concatenate(blocks, axis=0)

    # One slab for the head; zero-padding is mathematically inert (leaky(0)=0,
    # padded d1 output columns meet padded-zero d2 rows).
    def pad_to(a, rows, cols):
        return jnp.pad(a, ((0, rows - a.shape[0]), (0, cols - a.shape[1])))

    head_slab = jnp.concatenate([
        pad_to(params["d1_w_t"], N_FEAT, N_FEAT),   # rows 0:24        (24,12) -> (24,24)
        pad_to(params["d1_b"], 8, N_FEAT),          # rows 24:32
        pad_to(params["d2_w_t"], N_FEAT, N_FEAT),   # rows 32:56       (12,24) -> (24,24)
        pad_to(params["d2_b"], 8, N_FEAT),          # rows 56:64
        pad_to(params["fc_w_t"], H2, N_FEAT),       # rows 64:64+2H
        pad_to(params["fc_b"], 8, N_FEAT),          # rows 64+2H:72+2H
        pad_to(params["w"], 8, N_FEAT),             # rows 72+2H:80+2H (value at [0,0])
    ], axis=0)
    return lstm_slab, head_slab


# ----------------------------------------------------------------------------
# Forward: tiny host-side prep (gather / transpose / pad / mean) + ONE kernel.
# ----------------------------------------------------------------------------
def stacked_lstm_forward(x, params, n_hiddens, n_layers):
    B, T, _ = x.shape
    H = n_hiddens
    Bp = _round_up(B, 8)        # pad batch to the 8-sublane tile (free at B=2)

    x_sel = x[:, :, jnp.array(LEAV_IDX)]                  # (B, T, 24)
    conn = jnp.mean(x_sel, axis=1)                        # AdaptiveAvgPool1d(1) -> (B, 24)
    seq = jnp.transpose(x_sel, (1, 0, 2))                 # time-major (T, B, 24)
    seq = jnp.pad(seq, ((0, 0), (0, Bp - B), (0, 0)))
    xs2d = seq.reshape(T * Bp, N_FEAT)                    # row = t*Bp + b
    connp = jnp.pad(conn, ((0, Bp - B), (0, 0)))

    lstm_slab, head_slab = pack_kernel_params(params, H, n_layers)
    inputs = [xs2d, connp, lstm_slab, head_slab]

    out = pl.pallas_call(
        make_fused_kernel(n_layers, T, Bp, H),
        out_shape=jax.ShapeDtypeStruct((Bp, N_FEAT), jnp.float32),
        in_specs=[pl.BlockSpec(memory_space=pltpu.MemorySpace.VMEM)] * len(inputs),
        out_specs=pl.BlockSpec(memory_space=pltpu.MemorySpace.VMEM),
        scratch_shapes=[pltpu.VMEM((T * Bp, 2 * H), jnp.float32)],   # merged y_fwd|y_bwd sequence
    )(*inputs)
    return out[:B]
    # TODO(synk): inter-layer dropout(0.1) is train-mode only; eval forward omits it.


# ----------------------------------------------------------------------------
# Pure-JAX reference for the correctness check.
# ----------------------------------------------------------------------------
def forward_ref(x, params, n_hiddens, n_layers):
    H = n_hiddens
    x_sel = x[:, :, jnp.array(LEAV_IDX)]
    conn = jnp.mean(x_sel, axis=1)
    att = _leaky(conn)
    att = _leaky(att @ params["d1_w_t"] + params["d1_b"])
    att = jax.nn.sigmoid(att @ params["d2_w_t"] + params["d2_b"])

    inp = jnp.transpose(x_sel, (1, 0, 2))
    for layer in range(n_layers):
        outs = []
        for d in range(2):
            p = params["lstm"][layer][d]
            xin = inp if d == 0 else inp[::-1]
            B = xin.shape[1]

            def step(carry, x_t, p=p):
                h, c = carry
                gates = x_t @ p["wih_t"] + h @ p["whh_t"] + p["b"]
                i = jax.nn.sigmoid(gates[:, :H])
                f = jax.nn.sigmoid(gates[:, H:2 * H])
                g = jnp.tanh(gates[:, 2 * H:3 * H])
                o = jax.nn.sigmoid(gates[:, 3 * H:])
                c = f * c + i * g
                h = o * jnp.tanh(c)
                return (h, c), h

            _, ys = lax.scan(step, (jnp.zeros((B, H)), jnp.zeros((B, H))), xin)
            if d == 1:
                ys = ys[::-1]
            outs.append(ys)
        inp = jnp.concatenate(outs, axis=-1)
    last = inp[-1]
    out = _leaky(last) @ params["fc_w_t"] + params["fc_b"]
    mix = jax.nn.sigmoid(params["w"])
    return mix * conn * att + out * (1.0 - mix)


if __name__ == "__main__":
    key = jax.random.PRNGKey(0)
    kx, kp = jax.random.split(key)

    B, T, F = 2, 8, 88            # F must cover max(LEAV_IDX)=82
    n_hiddens, n_layers = 32, 2

    x = jax.random.normal(kx, (B, T, F), dtype=jnp.float32)
    params = init_params(kp, n_hiddens, n_layers)

    run = jax.jit(lambda xx: stacked_lstm_forward(xx, params, n_hiddens, n_layers))
    out = jax.block_until_ready(run(x))

    with jax.default_matmul_precision("highest"):
        ref = forward_ref(x, params, n_hiddens, n_layers)
    # 2e-3 margin (per review): in-kernel dots use the default TPU matmul
    # precision and EUP sigmoid/tanh approximations differ slightly from XLA's
    # host/"highest"-precision reference; real bugs show up at >=1e-1.
    np.testing.assert_allclose(np.asarray(out), np.asarray(ref), rtol=2e-3, atol=2e-3)

    print("KERNEL_OK")
</pallas_src>

<mosaic_0001>
module attributes {stable_mosaic.version = 11 : i64} {
  func.func @kernel(%arg0: memref<64x24xf32, #tpu.memory_space<vmem>>, %arg1: memref<8x24xf32, #tpu.memory_space<vmem>>, %arg2: memref<232x256xf32, #tpu.memory_space<vmem>>, %arg3: memref<144x24xf32, #tpu.memory_space<vmem>>, %arg4: memref<8x24xf32, #tpu.memory_space<vmem>>, %arg5: memref<64x64xf32, #tpu.memory_space<vmem>>) attributes {dimension_semantics = [], scalar_prefetch = 0 : i64, scratch_operands = 1 : i64, tpu.core_type = #tpu.core_type<tc>} {
    %0 = tpu.iota {dimensions = array<i32: 1>} : vector<8x256xi32>
    %c32_i32 = arith.constant 32 : i32
    %1 = vector.broadcast %c32_i32 : i32 to vector<8x256xi32>
    %2 = arith.andi %0, %1 : vector<8x256xi32>
    %c0_i32 = arith.constant 0 : i32
    %3 = vector.broadcast %c0_i32 : i32 to vector<8x256xi32>
    %4 = arith.cmpi eq, %2, %3 : vector<8x256xi32>
    %5 = tpu.iota {dimensions = array<i32: 1>} : vector<8x64xi32>
    %c32_i32_0 = arith.constant 32 : i32
    %6 = vector.broadcast %c32_i32_0 : i32 to vector<8x64xi32>
    %7 = arith.cmpi slt, %5, %6 : vector<8x64xi32>
    %c0 = arith.constant 0 : index
    %c0_1 = arith.constant 0 : index
    %8 = vector.load %arg2[%c0, %c0_1] : memref<232x256xf32, #tpu.memory_space<vmem>>, vector<24x256xf32>
    %c24 = arith.constant 24 : index
    %c0_2 = arith.constant 0 : index
    %9 = vector.load %arg2[%c24, %c0_2] : memref<232x256xf32, #tpu.memory_space<vmem>>, vector<64x256xf32>
    %c88 = arith.constant 88 : index
    %c0_3 = arith.constant 0 : index
    %10 = vector.load %arg2[%c88, %c0_3] : memref<232x256xf32, #tpu.memory_space<vmem>>, vector<1x256xf32>
    %c0_4 = arith.constant 0 : index
    %c0_5 = arith.constant 0 : index
    %11 = vector.load %arg0[%c0_4, %c0_5] : memref<64x24xf32, #tpu.memory_space<vmem>>, vector<64x24xf32>
    %cst = arith.constant dense<0.000000e+00> : vector<64x256xf32>
    %12 = tpu.matmul %11, %8, %cst {dimension_numbers = #tpu.dot_dimension_numbers<[1], [0], [0], [1], [0, 0, 1, 1], [], []>} : vector<64x24xf32>, vector<24x256xf32>, vector<64x256xf32> -> vector<64x256xf32>
    %13 = vector.broadcast %10 : vector<1x256xf32> to vector<64x256xf32>
    %14 = arith.addf %12, %13 : vector<64x256xf32>
    %cst_6 = arith.constant 0.000000e+00 : f32
    %15 = vector.broadcast %cst_6 : f32 to vector<8x64xf32>
    %16 = vector.extract_strided_slice %14 {offsets = [0, 0], sizes = [8, 256], strides = [1, 1]} : vector<64x256xf32> to vector<8x256xf32>
    %17 = vector.extract_strided_slice %14 {offsets = [56, 0], sizes = [8, 256], strides = [1, 1]} : vector<64x256xf32> to vector<8x256xf32>
    %18 = arith.select %4, %16, %17 : vector<8x256xi1>, vector<8x256xf32>
    %19 = arith.negf %18 : vector<8x256xf32>
    %20 = math.exp %19 : vector<8x256xf32>
    %cst_7 = arith.constant 1.000000e+00 : f32
    %21 = vector.broadcast %cst_7 : f32 to vector<8x256xf32>
    %22 = arith.addf %21, %20 : vector<8x256xf32>
    %23 = arith.divf %21, %22 : vector<8x256xf32>
    %24 = vector.extract_strided_slice %18 {offsets = [0, 128], sizes = [8, 64], strides = [1, 1]} : vector<8x256xf32> to vector<8x64xf32>
    %25 = math.tanh %24 : vector<8x64xf32>
    %26 = vector.extract_strided_slice %23 {offsets = [0, 64], sizes = [8, 64], strides = [1, 1]} : vector<8x256xf32> to vector<8x64xf32>
    %27 = arith.mulf %26, %15 : vector<8x64xf32>
    %28 = vector.extract_strided_slice %23 {offsets = [0, 0], sizes = [8, 64], strides = [1, 1]} : vector<8x256xf32> to vector<8x64xf32>
    %29 = arith.mulf %28, %25 : vector<8x64xf32>
    %30 = arith.addf %27, %29 : vector<8x64xf32>
    %31 = vector.extract_strided_slice %23 {offsets = [0, 192], sizes = [8, 64], strides = [1, 1]} : vector<8x256xf32> to vector<8x64xf32>
    %32 = math.tanh %30 : vector<8x64xf32>
    %33 = arith.mulf %31, %32 : vector<8x64xf32>
    %34 = vector.extract_strided_slice %33 {offsets = [0, 0], sizes = [8, 32], strides = [1, 1]} : vector<8x64xf32> to vector<8x32xf32>
    %c0_8 = arith.constant 0 : index
    %c0_9 = arith.constant 0 : index
    %35 = vector.load %arg5[%c0_8, %c0_9] : memref<64x64xf32, #tpu.memory_space<vmem>>, vector<8x32xf32>
    tpu.vector_store %arg5[%c0_8, %c0_9], %34 {strides = array<i32>} : memref<64x64xf32, #tpu.memory_space<vmem>>, vector<8x32xf32>,
    %36 = vector.extract_strided_slice %33 {offsets = [0, 32], sizes = [8, 32], strides = [1, 1]} : vector<8x64xf32> to vector<8x32xf32>
    %c56 = arith.constant 56 : index
    %c32 = arith.constant 32 : index
    %37 = vector.load %arg5[%c56, %c32] : memref<64x64xf32, #tpu.memory_space<vmem>>, vector<8x32xf32>
    tpu.vector_store %arg5[%c56, %c32], %36 {strides = array<i32>} : memref<64x64xf32, #tpu.memory_space<vmem>>, vector<8x32xf32>,
    %38 = vector.extract_strided_slice %14 {offsets = [8, 0], sizes = [8, 256], strides = [1, 1]} : vector<64x256xf32> to vector<8x256xf32>
    %39 = vector.extract_strided_slice %14 {offsets = [48, 0], sizes = [8, 256], strides = [1, 1]} : vector<64x256xf32> to vector<8x256xf32>
    %40 = arith.select %4, %38, %39 : vector<8x256xi1>, vector<8x256xf32>
    %cst_10 = arith.constant dense<0.000000e+00> : vector<8x256xf32>
    %41 = tpu.matmul %33, %9, %cst_10 {dimension_numbers = #tpu.dot_dimension_numbers<[1], [0], [0], [1], [0, 0, 1, 1], [], []>} : vector<8x64xf32>, vector<64x256xf32>, vector<8x256xf32> -> vector<8x256xf32>
    %42 = arith.addf %40, %41 : vector<8x256xf32>
    %43 = arith.negf %42 : vector<8x256xf32>
    %44 = math.exp %43 : vector<8x256xf32>
    %cst_11 = arith.constant 1.000000e+00 : f32
    %45 = vector.broadcast %cst_11 : f32 to vector<8x256xf32>
    %46 = arith.addf %45, %44 : vector<8x256xf32>
    %47 = arith.divf %45, %46 : vector<8x256xf32>
    %48 = vector.extract_strided_slice %42 {offsets = [0, 128], sizes = [8, 64], strides = [1, 1]} : vector<8x256xf32> to vector<8x64xf32>
    %49 = math.tanh %48 : vector<8x64xf32>
    %50 = vector.extract_strided_slice %47 {offsets = [0, 64], sizes = [8, 64], strides = [1, 1]} : vector<8x256xf32> to vector<8x64xf32>
    %51 = arith.mulf %50, %30 : vector<8x64xf32>
    %52 = vector.extract_strided_slice %47 {offsets = [0, 0], sizes = [8, 64], strides = [1, 1]} : vector<8x256xf32> to vector<8x64xf32>
    %53 = arith.mulf %52, %49 : vector<8x64xf32>
    %54 = arith.addf %51, %53 : vector<8x64xf32>
    %55 = vector.extract_strided_slice %47 {offsets = [0, 192], sizes = [8, 64], strides = [1, 1]} : vector<8x256xf32> to vector<8x64xf32>
    %56 = math.tanh %54 : vector<8x64xf32>
    %57 = arith.mulf %55, %56 : vector<8x64xf32>
    %58 = vector.extract_strided_slice %57 {offsets = [0, 0], sizes = [8, 32], strides = [1, 1]} : vector<8x64xf32> to vector<8x32xf32>
    %c8 = arith.constant 8 : index
    %c0_12 = arith.constant 0 : index
    %59 = vector.load %arg5[%c8, %c0_12] : memref<64x64xf32, #tpu.memory_space<vmem>>, vector<8x32xf32>
    tpu.vector_store %arg5[%c8, %c0_12], %58 {strides = array<i32>} : memref<64x64xf32, #tpu.memory_space<vmem>>, vector<8x32xf32>,
    %60 = vector.extract_strided_slice %57 {offsets = [0, 32], sizes = [8, 32], strides = [1, 1]} : vector<8x64xf32> to vector<8x32xf32>
    %c48 = arith.constant 48 : index
    %c32_13 = arith.constant 32 : index
    %61 = vector.load %arg5[%c48, %c32_13] : memref<64x64xf32, #tpu.memory_space<vmem>>, vector<8x32xf32>
    tpu.vector_store %arg5[%c48, %c32_13], %60 {strides = array<i32>} : memref<64x64xf32, #tpu.memory_space<vmem>>, vector<8x32xf32>,
    %62 = vector.extract_strided_slice %14 {offsets = [16, 0], sizes = [8, 256], strides = [1, 1]} : vector<64x256xf32> to vector<8x256xf32>
    %63 = vector.extract_strided_slice %14 {offsets = [40, 0], sizes = [8, 256], strides = [1, 1]} : vector<64x256xf32> to vector<8x256xf32>
    %64 = arith.select %4, %62, %63 : vector<8x256xi1>, vector<8x256xf32>
    %cst_14 = arith.constant dense<0.000000e+00> : vector<8x256xf32>
    %65 = tpu.matmul %57, %9, %cst_14 {dimension_numbers = #tpu.dot_dimension_numbers<[1], [0], [0], [1], [0, 0, 1, 1], [], []>} : vector<8x64xf32>, vector<64x256xf32>, vector<8x256xf32> -> vector<8x256xf32>
    %66 = arith.addf %64, %65 : vector<8x256xf32>
    %67 = arith.negf %66 : vector<8x256xf32>
    %68 = math.exp %67 : vector<8x256xf32>
    %cst_15 = arith.constant 1.000000e+00 : f32
    %69 = vector.broadcast %cst_15 : f32 to vector<8x256xf32>
    %70 = arith.addf %69, %68 : vector<8x256xf32>
    %71 = arith.divf %69, %70 : vector<8x256xf32>
    %72 = vector.extract_strided_slice %66 {offsets = [0, 128], sizes = [8, 64], strides = [1, 1]} : vector<8x256xf32> to vector<8x64xf32>
    %73 = math.tanh %72 : vector<8x64xf32>
    %74 = vector.extract_strided_slice %71 {offsets = [0, 64], sizes = [8, 64], strides = [1, 1]} : vector<8x256xf32> to vector<8x64xf32>
    %75 = arith.mulf %74, %54 : vector<8x64xf32>
    %76 = vector.extract_strided_slice %71 {offsets = [0, 0], sizes = [8, 64], strides = [1, 1]} : vector<8x256xf32> to vector<8x64xf32>
    %77 = arith.mulf %76, %73 : vector<8x64xf32>
    %78 = arith.addf %75, %77 : vector<8x64xf32>
    %79 = vector.extract_strided_slice %71 {offsets = [0, 192], sizes = [8, 64], strides = [1, 1]} : vector<8x256xf32> to vector<8x64xf32>
    %80 = math.tanh %78 : vector<8x64xf32>
    %81 = arith.mulf %79, %80 : vector<8x64xf32>
    %82 = vector.extract_strided_slice %81 {offsets = [0, 0], sizes = [8, 32], strides = [1, 1]} : vector<8x64xf32> to vector<8x32xf32>
    %c16 = arith.constant 16 : index
    %c0_16 = arith.constant 0 : index
    %83 = vector.load %arg5[%c16, %c0_16] : memref<64x64xf32, #tpu.memory_space<vmem>>, vector<8x32xf32>
    tpu.vector_store %arg5[%c16, %c0_16], %82 {strides = array<i32>} : memref<64x64xf32, #tpu.memory_space<vmem>>, vector<8x32xf32>,
    %84 = vector.extract_strided_slice %81 {offsets = [0, 32], sizes = [8, 32], strides = [1, 1]} : vector<8x64xf32> to vector<8x32xf32>
    %c40 = arith.constant 40 : index
    %c32_17 = arith.constant 32 : index
    %85 = vector.load %arg5[%c40, %c32_17] : memref<64x64xf32, #tpu.memory_space<vmem>>, vector<8x32xf32>
    tpu.vector_store %arg5[%c40, %c32_17], %84 {strides = array<i32>} : memref<64x64xf32, #tpu.memory_space<vmem>>, vector<8x32xf32>,
    %86 = vector.extract_strided_slice %14 {offsets = [24, 0], sizes = [8, 256], strides = [1, 1]} : vector<64x256xf32> to vector<8x256xf32>
    %87 = vector.extract_strided_slice %14 {offsets = [32, 0], sizes = [8, 256], strides = [1, 1]} : vector<64x256xf32> to vector<8x256xf32>
    %88 = arith.select %4, %86, %87 : vector<8x256xi1>, vector<8x256xf32>
    %cst_18 = arith.constant dense<0.000000e+00> : vector<8x256xf32>
    %89 = tpu.matmul %81, %9, %cst_18 {dimension_numbers = #tpu.dot_dimension_numbers<[1], [0], [0], [1], [0, 0, 1, 1], [], []>} : vector<8x64xf32>, vector<64x256xf32>, vector<8x256xf32> -> vector<8x256xf32>
    %90 = arith.addf %88, %89 : vector<8x256xf32>
    %91 = arith.negf %90 : vector<8x256xf32>
    %92 = math.exp %91 : vector<8x256xf32>
    %cst_19 = arith.constant 1.000000e+00 : f32
    %93 = vector.broadcast %cst_19 : f32 to vector<8x256xf32>
    %94 = arith.addf %93, %92 : vector<8x256xf32>
    %95 = arith.divf %93, %94 : vector<8x256xf32>
    %96 = vector.extract_strided_slice %90 {offsets = [0, 128], sizes = [8, 64], strides = [1, 1]} : vector<8x256xf32> to vector<8x64xf32>
    %97 = math.tanh %96 : vector<8x64xf32>
    %98 = vector.extract_strided_slice %95 {offsets = [0, 64], sizes = [8, 64], strides = [1, 1]} : vector<8x256xf32> to vector<8x64xf32>
    %99 = arith.mulf %98, %78 : vector<8x64xf32>
    %100 = vector.extract_strided_slice %95 {offsets = [0, 0], sizes = [8, 64], strides = [1, 1]} : vector<8x256xf32> to vector<8x64xf32>
    %101 = arith.mulf %100, %97 : vector<8x64xf32>
    %102 = arith.addf %99, %101 : vector<8x64xf32>
    %103 = vector.extract_strided_slice %95 {offsets = [0, 192], sizes = [8, 64], strides = [1, 1]} : vector<8x256xf32> to vector<8x64xf32>
    %104 = math.tanh %102 : vector<8x64xf32>
    %105 = arith.mulf %103, %104 : vector<8x64xf32>
    %106 = vector.extract_strided_slice %105 {offsets = [0, 0], sizes = [8, 32], strides = [1, 1]} : vector<8x64xf32> to vector<8x32xf32>
    %c24_20 = arith.constant 24 : index
    %c0_21 = arith.constant 0 : index
    %107 = vector.load %arg5[%c24_20, %c0_21] : memref<64x64xf32, #tpu.memory_space<vmem>>, vector<8x32xf32>
    tpu.vector_store %arg5[%c24_20, %c0_21], %106 {strides = array<i32>} : memref<64x64xf32, #tpu.memory_space<vmem>>, vector<8x32xf32>,
    %108 = vector.extract_strided_slice %105 {offsets = [0, 32], sizes = [8, 32], strides = [1, 1]} : vector<8x64xf32> to vector<8x32xf32>
    %c32_22 = arith.constant 32 : index
    %c32_23 = arith.constant 32 : index
    %109 = vector.load %arg5[%c32_22, %c32_23] : memref<64x64xf32, #tpu.memory_space<vmem>>, vector<8x32xf32>
    tpu.vector_store %arg5[%c32_22, %c32_23], %108 {strides = array<i32>} : memref<64x64xf32, #tpu.memory_space<vmem>>, vector<8x32xf32>,
    %110 = vector.extract_strided_slice %14 {offsets = [32, 0], sizes = [8, 256], strides = [1, 1]} : vector<64x256xf32> to vector<8x256xf32>
    %111 = vector.extract_strided_slice %14 {offsets = [24, 0], sizes = [8, 256], strides = [1, 1]} : vector<64x256xf32> to vector<8x256xf32>
    %112 = arith.select %4, %110, %111 : vector<8x256xi1>, vector<8x256xf32>
    %cst_24 = arith.constant dense<0.000000e+00> : vector<8x256xf32>
    %113 = tpu.matmul %105, %9, %cst_24 {dimension_numbers = #tpu.dot_dimension_numbers<[1], [0], [0], [1], [0, 0, 1, 1], [], []>} : vector<8x64xf32>, vector<64x256xf32>, vector<8x256xf32> -> vector<8x256xf32>
    %114 = arith.addf %112, %113 : vector<8x256xf32>
    %115 = arith.negf %114 : vector<8x256xf32>
    %116 = math.exp %115 : vector<8x256xf32>
    %cst_25 = arith.constant 1.000000e+00 : f32
    %117 = vector.broadcast %cst_25 : f32 to vector<8x256xf32>
    %118 = arith.addf %117, %116 : vector<8x256xf32>
    %119 = arith.divf %117, %118 : vector<8x256xf32>
    %120 = vector.extract_strided_slice %114 {offsets = [0, 128], sizes = [8, 64], strides = [1, 1]} : vector<8x256xf32> to vector<8x64xf32>
    %121 = math.tanh %120 : vector<8x64xf32>
    %122 = vector.extract_strided_slice %119 {offsets = [0, 64], sizes = [8, 64], strides = [1, 1]} : vector<8x256xf32> to vector<8x64xf32>
    %123 = arith.mulf %122, %102 : vector<8x64xf32>
    %124 = vector.extract_strided_slice %119 {offsets = [0, 0], sizes = [8, 64], strides = [1, 1]} : vector<8x256xf32> to vector<8x64xf32>
    %125 = arith.mulf %124, %121 : vector<8x64xf32>
    %126 = arith.addf %123, %125 : vector<8x64xf32>
    %127 = vector.extract_strided_slice %119 {offsets = [0, 192], sizes = [8, 64], strides = [1, 1]} : vector<8x256xf32> to vector<8x64xf32>
    %128 = math.tanh %126 : vector<8x64xf32>
    %129 = arith.mulf %127, %128 : vector<8x64xf32>
    %130 = vector.extract_strided_slice %129 {offsets = [0, 0], sizes = [8, 32], strides = [1, 1]} : vector<8x64xf32> to vector<8x32xf32>
    %c32_26 = arith.constant 32 : index
    %c0_27 = arith.constant 0 : index
    %131 = vector.load %arg5[%c32_26, %c0_27] : memref<64x64xf32, #tpu.memory_space<vmem>>, vector<8x32xf32>
    tpu.vector_store %arg5[%c32_26, %c0_27], %130 {strides = array<i32>} : memref<64x64xf32, #tpu.memory_space<vmem>>, vector<8x32xf32>,
    %132 = vector.extract_strided_slice %129 {offsets = [0, 32], sizes = [8, 32], strides = [1, 1]} : vector<8x64xf32> to vector<8x32xf32>
    %c24_28 = arith.constant 24 : index
    %c32_29 = arith.constant 32 : index
    %133 = vector.load %arg5[%c24_28, %c32_29] : memref<64x64xf32, #tpu.memory_space<vmem>>, vector<8x32xf32>
    tpu.vector_store %arg5[%c24_28, %c32_29], %132 {strides = array<i32>} : memref<64x64xf32, #tpu.memory_space<vmem>>, vector<8x32xf32>,
    %134 = vector.extract_strided_slice %14 {offsets = [40, 0], sizes = [8, 256], strides = [1, 1]} : vector<64x256xf32> to vector<8x256xf32>
    %135 = vector.extract_strided_slice %14 {offsets = [16, 0], sizes = [8, 256], strides = [1, 1]} : vector<64x256xf32> to vector<8x256xf32>
    %136 = arith.select %4, %134, %135 : vector<8x256xi1>, vector<8x256xf32>
    %cst_30 = arith.constant dense<0.000000e+00> : vector<8x256xf32>
    %137 = tpu.matmul %129, %9, %cst_30 {dimension_numbers = #tpu.dot_dimension_numbers<[1], [0], [0], [1], [0, 0, 1, 1], [], []>} : vector<8x64xf32>, vector<64x256xf32>, vector<8x256xf32> -> vector<8x256xf32>
    %138 = arith.addf %136, %137 : vector<8x256xf32>
    %139 = arith.negf %138 : vector<8x256xf32>
    %140 = math.exp %139 : vector<8x256xf32>
    %cst_31 = arith.constant 1.000000e+00 : f32
    %141 = vector.broadcast %cst_31 : f32 to vector<8x256xf32>
    %142 = arith.addf %141, %140 : vector<8x256xf32>
    %143 = arith.divf %141, %142 : vector<8x256xf32>
    %144 = vector.extract_strided_slice %138 {offsets = [0, 128], sizes = [8, 64], strides = [1, 1]} : vector<8x256xf32> to vector<8x64xf32>
    %145 = math.tanh %144 : vector<8x64xf32>
    %146 = vector.extract_strided_slice %143 {offsets = [0, 64], sizes = [8, 64], strides = [1, 1]} : vector<8x256xf32> to vector<8x64xf32>
    %147 = arith.mulf %146, %126 : vector<8x64xf32>
    %148 = vector.extract_strided_slice %143 {offsets = [0, 0], sizes = [8, 64], strides = [1, 1]} : vector<8x256xf32> to vector<8x64xf32>
    %149 = arith.mulf %148, %145 : vector<8x64xf32>
    %150 = arith.addf %147, %149 : vector<8x64xf32>
    %151 = vector.extract_strided_slice %143 {offsets = [0, 192], sizes = [8, 64], strides = [1, 1]} : vector<8x256xf32> to vector<8x64xf32>
    %152 = math.tanh %150 : vector<8x64xf32>
    %153 = arith.mulf %151, %152 : vector<8x64xf32>
    %154 = vector.extract_strided_slice %153 {offsets = [0, 0], sizes = [8, 32], strides = [1, 1]} : vector<8x64xf32> to vector<8x32xf32>
    %c40_32 = arith.constant 40 : index
    %c0_33 = arith.constant 0 : index
    %155 = vector.load %arg5[%c40_32, %c0_33] : memref<64x64xf32, #tpu.memory_space<vmem>>, vector<8x32xf32>
    tpu.vector_store %arg5[%c40_32, %c0_33], %154 {strides = array<i32>} : memref<64x64xf32, #tpu.memory_space<vmem>>, vector<8x32xf32>,
    %156 = vector.extract_strided_slice %153 {offsets = [0, 32], sizes = [8, 32], strides = [1, 1]} : vector<8x64xf32> to vector<8x32xf32>
    %c16_34 = arith.constant 16 : index
    %c32_35 = arith.constant 32 : index
    %157 = vector.load %arg5[%c16_34, %c32_35] : memref<64x64xf32, #tpu.memory_space<vmem>>, vector<8x32xf32>
    tpu.vector_store %arg5[%c16_34, %c32_35], %156 {strides = array<i32>} : memref<64x64xf32, #tpu.memory_space<vmem>>, vector<8x32xf32>,
    %158 = vector.extract_strided_slice %14 {offsets = [48, 0], sizes = [8, 256], strides = [1, 1]} : vector<64x256xf32> to vector<8x256xf32>
    %159 = vector.extract_strided_slice %14 {offsets = [8, 0], sizes = [8, 256], strides = [1, 1]} : vector<64x256xf32> to vector<8x256xf32>
    %160 = arith.select %4, %158, %159 : vector<8x256xi1>, vector<8x256xf32>
    %cst_36 = arith.constant dense<0.000000e+00> : vector<8x256xf32>
    %161 = tpu.matmul %153, %9, %cst_36 {dimension_numbers = #tpu.dot_dimension_numbers<[1], [0], [0], [1], [0, 0, 1, 1], [], []>} : vector<8x64xf32>, vector<64x256xf32>, vector<8x256xf32> -> vector<8x256xf32>
    %162 = arith.addf %160, %161 : vector<8x256xf32>
    %163 = arith.negf %162 : vector<8x256xf32>
    %164 = math.exp %163 : vector<8x256xf32>
    %cst_37 = arith.constant 1.000000e+00 : f32
    %165 = vector.broadcast %cst_37 : f32 to vector<8x256xf32>
    %166 = arith.addf %165, %164 : vector<8x256xf32>
    %167 = arith.divf %165, %166 : vector<8x256xf32>
    %168 = vector.extract_strided_slice %162 {offsets = [0, 128], sizes = [8, 64], strides = [1, 1]} : vector<8x256xf32> to vector<8x64xf32>
    %169 = math.tanh %168 : vector<8x64xf32>
    %170 = vector.extract_strided_slice %167 {offsets = [0, 64], sizes = [8, 64], strides = [1, 1]} : vector<8x256xf32> to vector<8x64xf32>
    %171 = arith.mulf %170, %150 : vector<8x64xf32>
    %172 = vector.extract_strided_slice %167 {offsets = [0, 0], sizes = [8, 64], strides = [1, 1]} : vector<8x256xf32> to vector<8x64xf32>
    %173 = arith.mulf %172, %169 : vector<8x64xf32>
    %174 = arith.addf %171, %173 : vector<8x64xf32>
    %175 = vector.extract_strided_slice %167 {offsets = [0, 192], sizes = [8, 64], strides = [1, 1]} : vector<8x256xf32> to vector<8x64xf32>
    %176 = math.tanh %174 : vector<8x64xf32>
    %177 = arith.mulf %175, %176 : vector<8x64xf32>
    %178 = vector.extract_strided_slice %177 {offsets = [0, 0], sizes = [8, 32], strides = [1, 1]} : vector<8x64xf32> to vector<8x32xf32>
    %c48_38 = arith.constant 48 : index
    %c0_39 = arith.constant 0 : index
    %179 = vector.load %arg5[%c48_38, %c0_39] : memref<64x64xf32, #tpu.memory_space<vmem>>, vector<8x32xf32>
    tpu.vector_store %arg5[%c48_38, %c0_39], %178 {strides = array<i32>} : memref<64x64xf32, #tpu.memory_space<vmem>>, vector<8x32xf32>,
    %180 = vector.extract_strided_slice %177 {offsets = [0, 32], sizes = [8, 32], strides = [1, 1]} : vector<8x64xf32> to vector<8x32xf32>
    %c8_40 = arith.constant 8 : index
    %c32_41 = arith.constant 32 : index
    %181 = vector.load %arg5[%c8_40, %c32_41] : memref<64x64xf32, #tpu.memory_space<vmem>>, vector<8x32xf32>
    tpu.vector_store %arg5[%c8_40, %c32_41], %180 {strides = array<i32>} : memref<64x64xf32, #tpu.memory_space<vmem>>, vector<8x32xf32>,
    %182 = vector.extract_strided_slice %14 {offsets = [56, 0], sizes = [8, 256], strides = [1, 1]} : vector<64x256xf32> to vector<8x256xf32>
    %183 = vector.extract_strided_slice %14 {offsets = [0, 0], sizes = [8, 256], strides = [1, 1]} : vector<64x256xf32> to vector<8x256xf32>
    %184 = arith.select %4, %182, %183 : vector<8x256xi1>, vector<8x256xf32>
    %cst_42 = arith.constant dense<0.000000e+00> : vector<8x256xf32>
    %185 = tpu.matmul %177, %9, %cst_42 {dimension_numbers = #tpu.dot_dimension_numbers<[1], [0], [0], [1], [0, 0, 1, 1], [], []>} : vector<8x64xf32>, vector<64x256xf32>, vector<8x256xf32> -> vector<8x256xf32>
    %186 = arith.addf %184, %185 : vector<8x256xf32>
    %187 = arith.negf %186 : vector<8x256xf32>
    %188 = math.exp %187 : vector<8x256xf32>
    %cst_43 = arith.constant 1.000000e+00 : f32
    %189 = vector.broadcast %cst_43 : f32 to vector<8x256xf32>
    %190 = arith.addf %189, %188 : vector<8x256xf32>
    %191 = arith.divf %189, %190 : vector<8x256xf32>
    %192 = vector.extract_strided_slice %186 {offsets = [0, 128], sizes = [8, 64], strides = [1, 1]} : vector<8x256xf32> to vector<8x64xf32>
    %193 = math.tanh %192 : vector<8x64xf32>
    %194 = vector.extract_strided_slice %191 {offsets = [0, 64], sizes = [8, 64], strides = [1, 1]} : vector<8x256xf32> to vector<8x64xf32>
    %195 = arith.mulf %194, %174 : vector<8x64xf32>
    %196 = vector.extract_strided_slice %191 {offsets = [0, 0], sizes = [8, 64], strides = [1, 1]} : vector<8x256xf32> to vector<8x64xf32>
    %197 = arith.mulf %196, %193 : vector<8x64xf32>
    %198 = arith.addf %195, %197 : vector<8x64xf32>
    %199 = vector.extract_strided_slice %191 {offsets = [0, 192], sizes = [8, 64], strides = [1, 1]} : vector<8x256xf32> to vector<8x64xf32>
    %200 = math.tanh %198 : vector<8x64xf32>
    %201 = arith.mulf %199, %200 : vector<8x64xf32>
    %202 = vector.extract_strided_slice %201 {offsets = [0, 0], sizes = [8, 32], strides = [1, 1]} : vector<8x64xf32> to vector<8x32xf32>
    %c56_44 = arith.constant 56 : index
    %c0_45 = arith.constant 0 : index
    %203 = vector.load %arg5[%c56_44, %c0_45] : memref<64x64xf32, #tpu.memory_space<vmem>>, vector<8x32xf32>
    tpu.vector_store %arg5[%c56_44, %c0_45], %202 {strides = array<i32>} : memref<64x64xf32, #tpu.memory_space<vmem>>, vector<8x32xf32>,
    %204 = vector.extract_strided_slice %201 {offsets = [0, 32], sizes = [8, 32], strides = [1, 1]} : vector<8x64xf32> to vector<8x32xf32>
    %c0_46 = arith.constant 0 : index
    %c32_47 = arith.constant 32 : index
    %205 = vector.load %arg5[%c0_46, %c32_47] : memref<64x64xf32, #tpu.memory_space<vmem>>, vector<8x32xf32>
    tpu.vector_store %arg5[%c0_46, %c32_47], %204 {strides = array<i32>} : memref<64x64xf32, #tpu.memory_space<vmem>>, vector<8x32xf32>,
    %c96 = arith.constant 96 : index
    %c0_48 = arith.constant 0 : index
    %206 = vector.load %arg2[%c96, %c0_48] : memref<232x256xf32, #tpu.memory_space<vmem>>, vector<64x256xf32>
    %c160 = arith.constant 160 : index
    %c0_49 = arith.constant 0 : index
    %207 = vector.load %arg2[%c160, %c0_49] : memref<232x256xf32, #tpu.memory_space<vmem>>, vector<64x256xf32>
    %c224 = arith.constant 224 : index
    %c0_50 = arith.constant 0 : index
    %208 = vector.load %arg2[%c224, %c0_50] : memref<232x256xf32, #tpu.memory_space<vmem>>, vector<1x256xf32>
    %c0_51 = arith.constant 0 : index
    %c0_52 = arith.constant 0 : index
    %209 = vector.load %arg5[%c0_51, %c0_52] : memref<64x64xf32, #tpu.memory_space<vmem>>, vector<64x64xf32>
    %cst_53 = arith.constant dense<0.000000e+00> : vector<64x256xf32>
    %210 = tpu.matmul %209, %206, %cst_53 {dimension_numbers = #tpu.dot_dimension_numbers<[1], [0], [0], [1], [0, 0, 1, 1], [], []>} : vector<64x64xf32>, vector<64x256xf32>, vector<64x256xf32> -> vector<64x256xf32>
    %211 = vector.broadcast %208 : vector<1x256xf32> to vector<64x256xf32>
    %212 = arith.addf %210, %211 : vector<64x256xf32>
    %cst_54 = arith.constant 0.000000e+00 : f32
    %213 = vector.broadcast %cst_54 : f32 to vector<8x64xf32>
    %214 = vector.extract_strided_slice %212 {offsets = [0, 0], sizes = [8, 256], strides = [1, 1]} : vector<64x256xf32> to vector<8x256xf32>
    %215 = vector.extract_strided_slice %212 {offsets = [56, 0], sizes = [8, 256], strides = [1, 1]} : vector<64x256xf32> to vector<8x256xf32>
    %216 = arith.select %4, %214, %215 : vector<8x256xi1>, vector<8x256xf32>
    %217 = arith.negf %216 : vector<8x256xf32>
    %218 = math.exp %217 : vector<8x256xf32>
    %cst_55 = arith.constant 1.000000e+00 : f32
    %219 = vector.broadcast %cst_55 : f32 to vector<8x256xf32>
    %220 = arith.addf %219, %218 : vector<8x256xf32>
    %221 = arith.divf %219, %220 : vector<8x256xf32>
    %222 = vector.extract_strided_slice %216 {offsets = [0, 128], sizes = [8, 64], strides = [1, 1]} : vector<8x256xf32> to vector<8x64xf32>
    %223 = math.tanh %222 : vector<8x64xf32>
    %224 = vector.extract_strided_slice %221 {offsets = [0, 64], sizes = [8, 64], strides = [1, 1]} : vector<8x256xf32> to vector<8x64xf32>
    %225 = arith.mulf %224, %213 : vector<8x64xf32>
    %226 = vector.extract_strided_slice %221 {offsets = [0, 0], sizes = [8, 64], strides = [1, 1]} : vector<8x256xf32> to vector<8x64xf32>
    %227 = arith.mulf %226, %223 : vector<8x64xf32>
    %228 = arith.addf %225, %227 : vector<8x64xf32>
    %229 = vector.extract_strided_slice %221 {offsets = [0, 192], sizes = [8, 64], strides = [1, 1]} : vector<8x256xf32> to vector<8x64xf32>
    %230 = math.tanh %228 : vector<8x64xf32>
    %231 = arith.mulf %229, %230 : vector<8x64xf32>
    %232 = vector.extract_strided_slice %212 {offsets = [8, 0], sizes = [8, 256], strides = [1, 1]} : vector<64x256xf32> to vector<8x256xf32>
    %233 = vector.extract_strided_slice %212 {offsets = [48, 0], sizes = [8, 256], strides = [1, 1]} : vector<64x256xf32> to vector<8x256xf32>
    %234 = arith.select %4, %232, %233 : vector<8x256xi1>, vector<8x256xf32>
    %cst_56 = arith.constant dense<0.000000e+00> : vector<8x256xf32>
    %235 = tpu.matmul %231, %207, %cst_56 {dimension_numbers = #tpu.dot_dimension_numbers<[1], [0], [0], [1], [0, 0, 1, 1], [], []>} : vector<8x64xf32>, vector<64x256xf32>, vector<8x256xf32> -> vector<8x256xf32>
    %236 = arith.addf %234, %235 : vector<8x256xf32>
    %237 = arith.negf %236 : vector<8x256xf32>
    %238 = math.exp %237 : vector<8x256xf32>
    %cst_57 = arith.constant 1.000000e+00 : f32
    %239 = vector.broadcast %cst_57 : f32 to vector<8x256xf32>
    %240 = arith.addf %239, %238 : vector<8x256xf32>
    %241 = arith.divf %239, %240 : vector<8x256xf32>
    %242 = vector.extract_strided_slice %236 {offsets = [0, 128], sizes = [8, 64], strides = [1, 1]} : vector<8x256xf32> to vector<8x64xf32>
    %243 = math.tanh %242 : vector<8x64xf32>
    %244 = vector.extract_strided_slice %241 {offsets = [0, 64], sizes = [8, 64], strides = [1, 1]} : vector<8x256xf32> to vector<8x64xf32>
    %245 = arith.mulf %244, %228 : vector<8x64xf32>
    %246 = vector.extract_strided_slice %241 {offsets = [0, 0], sizes = [8, 64], strides = [1, 1]} : vector<8x256xf32> to vector<8x64xf32>
    %247 = arith.mulf %246, %243 : vector<8x64xf32>
    %248 = arith.addf %245, %247 : vector<8x64xf32>
    %249 = vector.extract_strided_slice %241 {offsets = [0, 192], sizes = [8, 64], strides = [1, 1]} : vector<8x256xf32> to vector<8x64xf32>
    %250 = math.tanh %248 : vector<8x64xf32>
    %251 = arith.mulf %249, %250 : vector<8x64xf32>
    %252 = vector.extract_strided_slice %212 {offsets = [16, 0], sizes = [8, 256], strides = [1, 1]} : vector<64x256xf32> to vector<8x256xf32>
    %253 = vector.extract_strided_slice %212 {offsets = [40, 0], sizes = [8, 256], strides = [1, 1]} : vector<64x256xf32> to vector<8x256xf32>
    %254 = arith.select %4, %252, %253 : vector<8x256xi1>, vector<8x256xf32>
    %cst_58 = arith.constant dense<0.000000e+00> : vector<8x256xf32>
    %255 = tpu.matmul %251, %207, %cst_58 {dimension_numbers = #tpu.dot_dimension_numbers<[1], [0], [0], [1], [0, 0, 1, 1], [], []>} : vector<8x64xf32>, vector<64x256xf32>, vector<8x256xf32> -> vector<8x256xf32>
    %256 = arith.addf %254, %255 : vector<8x256xf32>
    %257 = arith.negf %256 : vector<8x256xf32>
    %258 = math.exp %257 : vector<8x256xf32>
    %cst_59 = arith.constant 1.000000e+00 : f32
    %259 = vector.broadcast %cst_59 : f32 to vector<8x256xf32>
    %260 = arith.addf %259, %258 : vector<8x256xf32>
    %261 = arith.divf %259, %260 : vector<8x256xf32>
    %262 = vector.extract_strided_slice %256 {offsets = [0, 128], sizes = [8, 64], strides = [1, 1]} : vector<8x256xf32> to vector<8x64xf32>
    %263 = math.tanh %262 : vector<8x64xf32>
    %264 = vector.extract_strided_slice %261 {offsets = [0, 64], sizes = [8, 64], strides = [1, 1]} : vector<8x256xf32> to vector<8x64xf32>
    %265 = arith.mulf %264, %248 : vector<8x64xf32>
    %266 = vector.extract_strided_slice %261 {offsets = [0, 0], sizes = [8, 64], strides = [1, 1]} : vector<8x256xf32> to vector<8x64xf32>
    %267 = arith.mulf %266, %263 : vector<8x64xf32>
    %268 = arith.addf %265, %267 : vector<8x64xf32>
    %269 = vector.extract_strided_slice %261 {offsets = [0, 192], sizes = [8, 64], strides = [1, 1]} : vector<8x256xf32> to vector<8x64xf32>
    %270 = math.tanh %268 : vector<8x64xf32>
    %271 = arith.mulf %269, %270 : vector<8x64xf32>
    %272 = vector.extract_strided_slice %212 {offsets = [24, 0], sizes = [8, 256], strides = [1, 1]} : vector<64x256xf32> to vector<8x256xf32>
    %273 = vector.extract_strided_slice %212 {offsets = [32, 0], sizes = [8, 256], strides = [1, 1]} : vector<64x256xf32> to vector<8x256xf32>
    %274 = arith.select %4, %272, %273 : vector<8x256xi1>, vector<8x256xf32>
    %cst_60 = arith.constant dense<0.000000e+00> : vector<8x256xf32>
    %275 = tpu.matmul %271, %207, %cst_60 {dimension_numbers = #tpu.dot_dimension_numbers<[1], [0], [0], [1], [0, 0, 1, 1], [], []>} : vector<8x64xf32>, vector<64x256xf32>, vector<8x256xf32> -> vector<8x256xf32>
    %276 = arith.addf %274, %275 : vector<8x256xf32>
    %277 = arith.negf %276 : vector<8x256xf32>
    %278 = math.exp %277 : vector<8x256xf32>
    %cst_61 = arith.constant 1.000000e+00 : f32
    %279 = vector.broadcast %cst_61 : f32 to vector<8x256xf32>
    %280 = arith.addf %279, %278 : vector<8x256xf32>
    %281 = arith.divf %279, %280 : vector<8x256xf32>
    %282 = vector.extract_strided_slice %276 {offsets = [0, 128], sizes = [8, 64], strides = [1, 1]} : vector<8x256xf32> to vector<8x64xf32>
    %283 = math.tanh %282 : vector<8x64xf32>
    %284 = vector.extract_strided_slice %281 {offsets = [0, 64], sizes = [8, 64], strides = [1, 1]} : vector<8x256xf32> to vector<8x64xf32>
    %285 = arith.mulf %284, %268 : vector<8x64xf32>
    %286 = vector.extract_strided_slice %281 {offsets = [0, 0], sizes = [8, 64], strides = [1, 1]} : vector<8x256xf32> to vector<8x64xf32>
    %287 = arith.mulf %286, %283 : vector<8x64xf32>
    %288 = arith.addf %285, %287 : vector<8x64xf32>
    %289 = vector.extract_strided_slice %281 {offsets = [0, 192], sizes = [8, 64], strides = [1, 1]} : vector<8x256xf32> to vector<8x64xf32>
    %290 = math.tanh %288 : vector<8x64xf32>
    %291 = arith.mulf %289, %290 : vector<8x64xf32>
    %292 = vector.extract_strided_slice %212 {offsets = [32, 0], sizes = [8, 256], strides = [1, 1]} : vector<64x256xf32> to vector<8x256xf32>
    %293 = vector.extract_strided_slice %212 {offsets = [24, 0], sizes = [8, 256], strides = [1, 1]} : vector<64x256xf32> to vector<8x256xf32>
    %294 = arith.select %4, %292, %293 : vector<8x256xi1>, vector<8x256xf32>
    %cst_62 = arith.constant dense<0.000000e+00> : vector<8x256xf32>
    %295 = tpu.matmul %291, %207, %cst_62 {dimension_numbers = #tpu.dot_dimension_numbers<[1], [0], [0], [1], [0, 0, 1, 1], [], []>} : vector<8x64xf32>, vector<64x256xf32>, vector<8x256xf32> -> vector<8x256xf32>
    %296 = arith.addf %294, %295 : vector<8x256xf32>
    %297 = arith.negf %296 : vector<8x256xf32>
    %298 = math.exp %297 : vector<8x256xf32>
    %cst_63 = arith.constant 1.000000e+00 : f32
    %299 = vector.broadcast %cst_63 : f32 to vector<8x256xf32>
    %300 = arith.addf %299, %298 : vector<8x256xf32>
    %301 = arith.divf %299, %300 : vector<8x256xf32>
    %302 = vector.extract_strided_slice %296 {offsets = [0, 128], sizes = [8, 64], strides = [1, 1]} : vector<8x256xf32> to vector<8x64xf32>
    %303 = math.tanh %302 : vector<8x64xf32>
    %304 = vector.extract_strided_slice %301 {offsets = [0, 64], sizes = [8, 64], strides = [1, 1]} : vector<8x256xf32> to vector<8x64xf32>
    %305 = arith.mulf %304, %288 : vector<8x64xf32>
    %306 = vector.extract_strided_slice %301 {offsets = [0, 0], sizes = [8, 64], strides = [1, 1]} : vector<8x256xf32> to vector<8x64xf32>
    %307 = arith.mulf %306, %303 : vector<8x64xf32>
    %308 = arith.addf %305, %307 : vector<8x64xf32>
    %309 = vector.extract_strided_slice %301 {offsets = [0, 192], sizes = [8, 64], strides = [1, 1]} : vector<8x256xf32> to vector<8x64xf32>
    %310 = math.tanh %308 : vector<8x64xf32>
    %311 = arith.mulf %309, %310 : vector<8x64xf32>
    %312 = vector.extract_strided_slice %212 {offsets = [40, 0], sizes = [8, 256], strides = [1, 1]} : vector<64x256xf32> to vector<8x256xf32>
    %313 = vector.extract_strided_slice %212 {offsets = [16, 0], sizes = [8, 256], strides = [1, 1]} : vector<64x256xf32> to vector<8x256xf32>
    %314 = arith.select %4, %312, %313 : vector<8x256xi1>, vector<8x256xf32>
    %cst_64 = arith.constant dense<0.000000e+00> : vector<8x256xf32>
    %315 = tpu.matmul %311, %207, %cst_64 {dimension_numbers = #tpu.dot_dimension_numbers<[1], [0], [0], [1], [0, 0, 1, 1], [], []>} : vector<8x64xf32>, vector<64x256xf32>, vector<8x256xf32> -> vector<8x256xf32>
    %316 = arith.addf %314, %315 : vector<8x256xf32>
    %317 = arith.negf %316 : vector<8x256xf32>
    %318 = math.exp %317 : vector<8x256xf32>
    %cst_65 = arith.constant 1.000000e+00 : f32
    %319 = vector.broadcast %cst_65 : f32 to vector<8x256xf32>
    %320 = arith.addf %319, %318 : vector<8x256xf32>
    %321 = arith.divf %319, %320 : vector<8x256xf32>
    %322 = vector.extract_strided_slice %316 {offsets = [0, 128], sizes = [8, 64], strides = [1, 1]} : vector<8x256xf32> to vector<8x64xf32>
    %323 = math.tanh %322 : vector<8x64xf32>
    %324 = vector.extract_strided_slice %321 {offsets = [0, 64], sizes = [8, 64], strides = [1, 1]} : vector<8x256xf32> to vector<8x64xf32>
    %325 = arith.mulf %324, %308 : vector<8x64xf32>
    %326 = vector.extract_strided_slice %321 {offsets = [0, 0], sizes = [8, 64], strides = [1, 1]} : vector<8x256xf32> to vector<8x64xf32>
    %327 = arith.mulf %326, %323 : vector<8x64xf32>
    %328 = arith.addf %325, %327 : vector<8x64xf32>
    %329 = vector.extract_strided_slice %321 {offsets = [0, 192], sizes = [8, 64], strides = [1, 1]} : vector<8x256xf32> to vector<8x64xf32>
    %330 = math.tanh %328 : vector<8x64xf32>
    %331 = arith.mulf %329, %330 : vector<8x64xf32>
    %332 = vector.extract_strided_slice %212 {offsets = [48, 0], sizes = [8, 256], strides = [1, 1]} : vector<64x256xf32> to vector<8x256xf32>
    %333 = vector.extract_strided_slice %212 {offsets = [8, 0], sizes = [8, 256], strides = [1, 1]} : vector<64x256xf32> to vector<8x256xf32>
    %334 = arith.select %4, %332, %333 : vector<8x256xi1>, vector<8x256xf32>
    %cst_66 = arith.constant dense<0.000000e+00> : vector<8x256xf32>
    %335 = tpu.matmul %331, %207, %cst_66 {dimension_numbers = #tpu.dot_dimension_numbers<[1], [0], [0], [1], [0, 0, 1, 1], [], []>} : vector<8x64xf32>, vector<64x256xf32>, vector<8x256xf32> -> vector<8x256xf32>
    %336 = arith.addf %334, %335 : vector<8x256xf32>
    %337 = arith.negf %336 : vector<8x256xf32>
    %338 = math.exp %337 : vector<8x256xf32>
    %cst_67 = arith.constant 1.000000e+00 : f32
    %339 = vector.broadcast %cst_67 : f32 to vector<8x256xf32>
    %340 = arith.addf %339, %338 : vector<8x256xf32>
    %341 = arith.divf %339, %340 : vector<8x256xf32>
    %342 = vector.extract_strided_slice %336 {offsets = [0, 128], sizes = [8, 64], strides = [1, 1]} : vector<8x256xf32> to vector<8x64xf32>
    %343 = math.tanh %342 : vector<8x64xf32>
    %344 = vector.extract_strided_slice %341 {offsets = [0, 64], sizes = [8, 64], strides = [1, 1]} : vector<8x256xf32> to vector<8x64xf32>
    %345 = arith.mulf %344, %328 : vector<8x64xf32>
    %346 = vector.extract_strided_slice %341 {offsets = [0, 0], sizes = [8, 64], strides = [1, 1]} : vector<8x256xf32> to vector<8x64xf32>
    %347 = arith.mulf %346, %343 : vector<8x64xf32>
    %348 = arith.addf %345, %347 : vector<8x64xf32>
    %349 = vector.extract_strided_slice %341 {offsets = [0, 192], sizes = [8, 64], strides = [1, 1]} : vector<8x256xf32> to vector<8x64xf32>
    %350 = math.tanh %348 : vector<8x64xf32>
    %351 = arith.mulf %349, %350 : vector<8x64xf32>
    %352 = vector.extract_strided_slice %212 {offsets = [56, 0], sizes = [8, 256], strides = [1, 1]} : vector<64x256xf32> to vector<8x256xf32>
    %353 = vector.extract_strided_slice %212 {offsets = [0, 0], sizes = [8, 256], strides = [1, 1]} : vector<64x256xf32> to vector<8x256xf32>
    %354 = arith.select %4, %352, %353 : vector<8x256xi1>, vector<8x256xf32>
    %cst_68 = arith.constant dense<0.000000e+00> : vector<8x256xf32>
    %355 = tpu.matmul %351, %207, %cst_68 {dimension_numbers = #tpu.dot_dimension_numbers<[1], [0], [0], [1], [0, 0, 1, 1], [], []>} : vector<8x64xf32>, vector<64x256xf32>, vector<8x256xf32> -> vector<8x256xf32>
    %356 = arith.addf %354, %355 : vector<8x256xf32>
    %357 = arith.negf %356 : vector<8x256xf32>
    %358 = math.exp %357 : vector<8x256xf32>
    %cst_69 = arith.constant 1.000000e+00 : f32
    %359 = vector.broadcast %cst_69 : f32 to vector<8x256xf32>
    %360 = arith.addf %359, %358 : vector<8x256xf32>
    %361 = arith.divf %359, %360 : vector<8x256xf32>
    %362 = vector.extract_strided_slice %356 {offsets = [0, 128], sizes = [8, 64], strides = [1, 1]} : vector<8x256xf32> to vector<8x64xf32>
    %363 = math.tanh %362 : vector<8x64xf32>
    %364 = vector.extract_strided_slice %361 {offsets = [0, 64], sizes = [8, 64], strides = [1, 1]} : vector<8x256xf32> to vector<8x64xf32>
    %365 = arith.mulf %364, %348 : vector<8x64xf32>
    %366 = vector.extract_strided_slice %361 {offsets = [0, 0], sizes = [8, 64], strides = [1, 1]} : vector<8x256xf32> to vector<8x64xf32>
    %367 = arith.mulf %366, %363 : vector<8x64xf32>
    %368 = arith.addf %365, %367 : vector<8x64xf32>
    %369 = vector.extract_strided_slice %361 {offsets = [0, 192], sizes = [8, 64], strides = [1, 1]} : vector<8x256xf32> to vector<8x64xf32>
    %370 = math.tanh %368 : vector<8x64xf32>
    %371 = arith.mulf %369, %370 : vector<8x64xf32>
    %c0_70 = arith.constant 0 : index
    %c0_71 = arith.constant 0 : index
    %372 = vector.load %arg1[%c0_70, %c0_71] : memref<8x24xf32, #tpu.memory_space<vmem>>, vector<8x24xf32>
    %cst_72 = arith.constant 0.000000e+00 : f32
    %373 = vector.broadcast %cst_72 : f32 to vector<8x24xf32>
    %374 = arith.cmpf oge, %372, %373 : vector<8x24xf32>
    %cst_73 = arith.constant 1.000000e-01 : f32
    %375 = vector.broadcast %cst_73 : f32 to vector<8x24xf32>
    %376 = arith.mulf %375, %372 : vector<8x24xf32>
    %377 = arith.select %374, %372, %376 : vector<8x24xi1>, vector<8x24xf32>
    %c0_74 = arith.constant 0 : index
    %c0_75 = arith.constant 0 : index
    %378 = vector.load %arg3[%c0_74, %c0_75] : memref<144x24xf32, #tpu.memory_space<vmem>>, vector<24x24xf32>
    %cst_76 = arith.constant dense<0.000000e+00> : vector<8x24xf32>
    %379 = tpu.matmul %377, %378, %cst_76 {dimension_numbers = #tpu.dot_dimension_numbers<[1], [0], [0], [1], [0, 0, 1, 1], [], []>} : vector<8x24xf32>, vector<24x24xf32>, vector<8x24xf32> -> vector<8x24xf32>
    %c24_77 = arith.constant 24 : index
    %c0_78 = arith.constant 0 : index
    %380 = vector.load %arg3[%c24_77, %c0_78] : memref<144x24xf32, #tpu.memory_space<vmem>>, vector<1x24xf32>
    %381 = vector.broadcast %380 : vector<1x24xf32> to vector<8x24xf32>
    %382 = arith.addf %379, %381 : vector<8x24xf32>
    %cst_79 = arith.constant 0.000000e+00 : f32
    %383 = vector.broadcast %cst_79 : f32 to vector<8x24xf32>
    %384 = arith.cmpf oge, %382, %383 : vector<8x24xf32>
    %cst_80 = arith.constant 1.000000e-01 : f32
    %385 = vector.broadcast %cst_80 : f32 to vector<8x24xf32>
    %386 = arith.mulf %385, %382 : vector<8x24xf32>
    %387 = arith.select %384, %382, %386 : vector<8x24xi1>, vector<8x24xf32>
    %c32_81 = arith.constant 32 : index
    %c0_82 = arith.constant 0 : index
    %388 = vector.load %arg3[%c32_81, %c0_82] : memref<144x24xf32, #tpu.memory_space<vmem>>, vector<24x24xf32>
    %cst_83 = arith.constant dense<0.000000e+00> : vector<8x24xf32>
    %389 = tpu.matmul %387, %388, %cst_83 {dimension_numbers = #tpu.dot_dimension_numbers<[1], [0], [0], [1], [0, 0, 1, 1], [], []>} : vector<8x24xf32>, vector<24x24xf32>, vector<8x24xf32> -> vector<8x24xf32>
    %c56_84 = arith.constant 56 : index
    %c0_85 = arith.constant 0 : index
    %390 = vector.load %arg3[%c56_84, %c0_85] : memref<144x24xf32, #tpu.memory_space<vmem>>, vector<1x24xf32>
    %391 = vector.broadcast %390 : vector<1x24xf32> to vector<8x24xf32>
    %392 = arith.addf %389, %391 : vector<8x24xf32>
    %393 = arith.negf %392 : vector<8x24xf32>
    %394 = math.exp %393 : vector<8x24xf32>
    %cst_86 = arith.constant 1.000000e+00 : f32
    %395 = vector.broadcast %cst_86 : f32 to vector<8x24xf32>
    %396 = arith.addf %395, %394 : vector<8x24xf32>
    %397 = arith.divf %395, %396 : vector<8x24xf32>
    %398 = arith.select %7, %371, %231 : vector<8x64xi1>, vector<8x64xf32>
    %cst_87 = arith.constant 0.000000e+00 : f32
    %399 = vector.broadcast %cst_87 : f32 to vector<8x64xf32>
    %400 = arith.cmpf oge, %398, %399 : vector<8x64xf32>
    %cst_88 = arith.constant 1.000000e-01 : f32
    %401 = vector.broadcast %cst_88 : f32 to vector<8x64xf32>
    %402 = arith.mulf %401, %398 : vector<8x64xf32>
    %403 = arith.select %400, %398, %402 : vector<8x64xi1>, vector<8x64xf32>
    %c64 = arith.constant 64 : index
    %c0_89 = arith.constant 0 : index
    %404 = vector.load %arg3[%c64, %c0_89] : memref<144x24xf32, #tpu.memory_space<vmem>>, vector<64x24xf32>
    %cst_90 = arith.constant dense<0.000000e+00> : vector<8x24xf32>
    %405 = tpu.matmul %403, %404, %cst_90 {dimension_numbers = #tpu.dot_dimension_numbers<[1], [0], [0], [1], [0, 0, 1, 1], [], []>} : vector<8x64xf32>, vector<64x24xf32>, vector<8x24xf32> -> vector<8x24xf32>
    %c128 = arith.constant 128 : index
    %c0_91 = arith.constant 0 : index
    %406 = vector.load %arg3[%c128, %c0_91] : memref<144x24xf32, #tpu.memory_space<vmem>>, vector<1x24xf32>
    %407 = vector.broadcast %406 : vector<1x24xf32> to vector<8x24xf32>
    %408 = arith.addf %405, %407 : vector<8x24xf32>
    %c136 = arith.constant 136 : index
    %c0_92 = arith.constant 0 : index
    %409 = vector.load %arg3[%c136, %c0_92] : memref<144x24xf32, #tpu.memory_space<vmem>>, vector<1x1xf32>
    %410 = arith.negf %409 : vector<1x1xf32>
    %411 = math.exp %410 : vector<1x1xf32>
    %cst_93 = arith.constant 1.000000e+00 : f32
    %412 = vector.broadcast %cst_93 : f32 to vector<1x1xf32>
    %413 = arith.addf %412, %411 : vector<1x1xf32>
    %414 = arith.divf %412, %413 : vector<1x1xf32>
    %415 = vector.broadcast %414 : vector<1x1xf32> to vector<8x24xf32>
    %416 = arith.mulf %415, %372 : vector<8x24xf32>
    %417 = arith.mulf %416, %397 : vector<8x24xf32>
    %cst_94 = arith.constant 1.000000e+00 : f32
    %418 = vector.broadcast %cst_94 : f32 to vector<1x1xf32>
    %419 = arith.subf %418, %414 : vector<1x1xf32>
    %420 = vector.broadcast %419 : vector<1x1xf32> to vector<8x24xf32>
    %421 = arith.mulf %408, %420 : vector<8x24xf32>
    %422 = arith.addf %417, %421 : vector<8x24xf32>
    %c0_95 = arith.constant 0 : index
    %c0_96 = arith.constant 0 : index
    %423 = vector.load %arg4[%c0_95, %c0_96] : memref<8x24xf32, #tpu.memory_space<vmem>>, vector<8x24xf32>
    tpu.vector_store %arg4[%c0_95, %c0_96], %422 {strides = array<i32>} : memref<8x24xf32, #tpu.memory_space<vmem>>, vector<8x24xf32>,
    return
  }
}

</mosaic_0001>

<llo_original>
// kernel: _lambda_.1
$region0: #{_lambda_.1}
  #allocation0 [shape = 'u32[]', space=smem, size = 0x4, offset = 0x4, fixed_abs, tag = 'smem constant byte address 0x4 - core index']
  #allocation1 [shape = 'u32[72,128]{1,0:T(1,128)}', space=vmem, size = 0x9000, scoped, tag = 'internal scratch']
  #allocation2 [shape = 'f32[64,64]{1,0:T(8,128)}', space=vmem, size = 0x8000, scoped, tag = 'scratch operand']
  %s0 = inlined_call_operand.vmem [shape: f32[64,24], index: 0, kind: input, shape index: {}]
  %s1 = inlined_call_operand.vmem [shape: f32[8,24], index: 1, kind: input, shape index: {}]
  %s2 = inlined_call_operand.vmem [shape: f32[232,256], index: 2, kind: input, shape index: {}]
  %s3 = inlined_call_operand.hbm [shape: f32[144,24], index: 3, kind: input, shape index: {}]
  %s4 = inlined_call_operand.vmem [shape: f32[8,24], index: 4, kind: output, shape index: {}]
  %s5 = sld [smem:[#allocation0]]
  $region30: #{_lambda_.1} parent=0
    _
  %s7 = ssub.s32 1, %s5
  %s8 = scalar_select 0, %s7, %s5
  $region1: #{_lambda_.1} parent=0
    #allocation3 [shape = 'u8[73728]{0}', space=vmem, size = 0x12000, scoped, tag = 'input window, operand 3, single buffered']
    #allocation4 [shape = 's32[1]{0}', space=sflag, size = 0x4, scoped, tag = 'scoped memory for _lambda_.1']
    %9 = vsyncpa [#allocation4], 0
    // Predicated region
    $region2: #{_lambda_.1} parent=1 // pred_check
      _
    $region3: #{_lambda_.1} parent=1 // pred_check_branch
      %11 = sbr.rel (0) target = $region5
    $region4: #{_lambda_.1} parent=1 // pred_region
      _
    $region5: #{_lambda_.1} parent=1 // pred_fallthru
      _
    // Predicated region
    $region6: #{_lambda_.1} parent=1 // pred_check
      _
    $region7: #{_lambda_.1} parent=1 // pred_check_branch
      %13 = sbr.rel (0) target = $region9
    $region8: #{_lambda_.1} parent=1 // pred_region
      _
    $region9: #{_lambda_.1} parent=1 // pred_fallthru
      _
    // Predicated region
    $region10: #{_lambda_.1} parent=1 // pred_check
      _
    $region11: #{_lambda_.1} parent=1 // pred_check_branch
      %15 = sbr.rel (0) target = $region13
    $region12: #{_lambda_.1} parent=1 // pred_region
      _
    $region13: #{_lambda_.1} parent=1 // pred_fallthru
      _
    // Predicated region
    $region14: #{_lambda_.1} parent=1 // pred_check
      _
    $region15: #{_lambda_.1} parent=1 // pred_check_branch
      %17 = sbr.rel (0) target = $region17
    $region16: #{_lambda_.1} parent=1 // pred_region
      %19 = vsyncadd [#allocation4], 0
      %s20 = sshll.u32 %s3, 4
      %s21 = int_to_ptr.hbm [resolvable:$true] %s20
      %s22 = sshll.u32 [#allocation3], 4
      %s23 = int_to_ptr.vmem [resolvable:$true] %s22
      %28 = dma.hbm_to_vmem [thread:$0]  %s21, 2304, %s23, [#allocation4], 128, 128, 8
    $region17: #{_lambda_.1} parent=1 // pred_fallthru
      _
    // Predicated region
    $region18: #{_lambda_.1} parent=1 // pred_check
      _
    $region19: #{_lambda_.1} parent=1 // pred_check_branch
      %30 = sbr.rel (0) target = $region21
    $region20: #{_lambda_.1} parent=1 // pred_region
      %32 = dma.done [#allocation4], 2304
    $region21: #{_lambda_.1} parent=1 // pred_fallthru
      _
    %v33 = vlaneseq
    %v34 = vand.u32 %v33, 127
    %v35 = vadd.s32 %v34, 128
    %v36 = vand.u32 %v34, 32
    %v37 = vand.u32 %v35, 32
    %vm38 = vcmp.eq.s32.totalorder %v36, 0
    %vm39 = vcmp.eq.s32.totalorder %v37, 0
    %vm40 = vcmp.lt.s32.totalorder %v34, 32
    %v41 = vld [vmem:[%s2] sm:$0xff]
    %v42 = vld [vmem:[%s2 + $0x8] sm:$0xff]
    %v43 = vld [vmem:[%s2 + $0x10] sm:$0xff]
    %v44 = vld [vmem:[%s2 + $0x18] sm:$0xff]
    %v45 = vld [vmem:[%s2 + $0x20] sm:$0xff]
    %v46 = vld [vmem:[%s2 + $0x28] sm:$0xff]
    %v47 = vld [vmem:[%s2 + $0x30] sm:$0xff]
    %v48 = vld [vmem:[%s2 + $0x38] sm:$0xff]
    %v49 = vld [vmem:[%s2 + $0x40] sm:$0xff]
    %v50 = vld [vmem:[%s2 + $0x48] sm:$0xff]
    %v51 = vld [vmem:[%s2 + $0x50] sm:$0xff]
    %v52 = vld [vmem:[%s2 + $0x58] sm:$0xff]
    %v53 = vld [vmem:[%s2 + $0x60] sm:$0xff]
    %v54 = vld [vmem:[%s2 + $0x68] sm:$0xff]
    %v55 = vld [vmem:[%s2 + $0x70] sm:$0xff]
    %v56 = vld [vmem:[%s2 + $0x78] sm:$0xff]
    %v57 = vld [vmem:[%s2 + $0x80] sm:$0xff]
    %v58 = vld [vmem:[%s2 + $0x88] sm:$0xff]
    %v59 = vld [vmem:[%s2 + $0x90] sm:$0xff]
    %v60 = vld [vmem:[%s2 + $0x98] sm:$0xff]
    %v61 = vld [vmem:[%s2 + $0xa0] sm:$0xff]
    %v62 = vld [vmem:[%s2 + $0xa8] sm:$0xff]
    %s63 = scalar_lea.vmem %s2, 176
    %v64 = vld [vmem:[%s63] ss:$8 sm:$0x3]
    %v65 = vld [vmem:[%s0] sm:$0xff]
    %v66 = vld [vmem:[%s0 + $0x8] sm:$0xff]
    %v67 = vld [vmem:[%s0 + $0x10] sm:$0xff]
    %v68 = vld [vmem:[%s0 + $0x18] sm:$0xff]
    %v69 = vld [vmem:[%s0 + $0x20] sm:$0xff]
    %v70 = vld [vmem:[%s0 + $0x28] sm:$0xff]
    %v71 = vld [vmem:[%s0 + $0x30] sm:$0xff]
    %v72 = vld [vmem:[%s0 + $0x38] sm:$0xff]
    %v74 = vperm.slane %v64, 0
    %v75 = vperm.slane %v64, 1
    %vm78 = vcmask 195584
    %v80 = vsel %vm78, %v65, 0
    %v83 = vsel %vm78, %v66, 0
    %v86 = vsel %vm78, %v67, 0
    %v89 = vsel %vm78, %v68, 0
    %v92 = vsel %vm78, %v69, 0
    %v95 = vsel %vm78, %v70, 0
    %v98 = vsel %vm78, %v71, 0
    %v101 = vsel %vm78, %v72, 0
    %103 = vmatpush.msra.mxu0 0.0
    %104 = vmatpush.msra.mxu0 0.0
    %105 = vmatpush.msra.mxu0 0.0
    %106 = vmatpush.msra.mxu0 0.0
    %107 = vmatpush.msra.mxu0 0.0
    %108 = vmatpush.msra.mxu0 0.0
    %109 = vmatpush.msra.mxu0 0.0
    %110 = vmatpush.msra.mxu0 0.0
    %111 = vmatpush.msra.mxu0 0.0
    %112 = vmatpush.msra.mxu0 0.0
    %113 = vmatpush.msra.mxu0 0.0
    %114 = vmatpush.msra.mxu0 0.0
    %115 = vmatpush.msra.mxu0 0.0
    %116 = vmatpush.msra.mxu0 %v45
    %117 = vmatpush.msra.mxu0 %v43
    %118 = vmatpush.msra.mxu0 %v41
    %119 = vmatmul.f32.gmra.mxu0 %v80
    %v120 = vpop.f32.mrf.mxu0
    %v121 = vadd.f32 %v74, %v120
    %122 = vmatmul.f32.gmra.mxu0 %v83
    %v123 = vpop.f32.mrf.mxu0
    %v124 = vadd.f32 %v74, %v123
    %125 = vmatmul.f32.gmra.mxu0 %v86
    %v126 = vpop.f32.mrf.mxu0
    %v127 = vadd.f32 %v74, %v126
    %128 = vmatmul.f32.gmra.mxu0 %v89
    %v129 = vpop.f32.mrf.mxu0
    %v130 = vadd.f32 %v74, %v129
    %131 = vmatmul.f32.gmra.mxu0 %v92
    %v132 = vpop.f32.mrf.mxu0
    %v133 = vadd.f32 %v74, %v132
    %134 = vmatmul.f32.gmra.mxu0 %v95
    %v135 = vpop.f32.mrf.mxu0
    %v136 = vadd.f32 %v74, %v135
    %137 = vmatmul.f32.gmra.mxu0 %v98
    %v138 = vpop.f32.mrf.mxu0
    %v139 = vadd.f32 %v74, %v138
    %140 = vmatmul.f32.gmra.mxu0 %v101
    %v141 = vpop.f32.mrf.mxu0
    %v142 = vadd.f32 %v74, %v141
    %143 = vdwg.mxu0
    %144 = vmatpush.msra.mxu0 0.0
    %145 = vmatpush.msra.mxu0 0.0
    %146 = vmatpush.msra.mxu0 0.0
    %147 = vmatpush.msra.mxu0 0.0
    %148 = vmatpush.msra.mxu0 0.0
    %149 = vmatpush.msra.mxu0 0.0
    %150 = vmatpush.msra.mxu0 0.0
    %151 = vmatpush.msra.mxu0 0.0
    %152 = vmatpush.msra.mxu0 0.0
    %153 = vmatpush.msra.mxu0 0.0
    %154 = vmatpush.msra.mxu0 0.0
    %155 = vmatpush.msra.mxu0 0.0
    %156 = vmatpush.msra.mxu0 0.0
    %157 = vmatpush.msra.mxu0 %v46
    %158 = vmatpush.msra.mxu0 %v44
    %159 = vmatpush.msra.mxu0 %v42
    %160 = vmatmul.f32.gmra.mxu0 %v80
    %v161 = vpop.f32.mrf.mxu0
    %v162 = vadd.f32 %v75, %v161
    %163 = vmatmul.f32.gmra.mxu0 %v83
    %v164 = vpop.f32.mrf.mxu0
    %v165 = vadd.f32 %v75, %v164
    %166 = vmatmul.f32.gmra.mxu0 %v86
    %v167 = vpop.f32.mrf.mxu0
    %v168 = vadd.f32 %v75, %v167
    %169 = vmatmul.f32.gmra.mxu0 %v89
    %v170 = vpop.f32.mrf.mxu0
    %v171 = vadd.f32 %v75, %v170
    %172 = vmatmul.f32.gmra.mxu0 %v92
    %v173 = vpop.f32.mrf.mxu0
    %v174 = vadd.f32 %v75, %v173
    %175 = vmatmul.f32.gmra.mxu0 %v95
    %v176 = vpop.f32.mrf.mxu0
    %v177 = vadd.f32 %v75, %v176
    %178 = vmatmul.f32.gmra.mxu0 %v98
    %v179 = vpop.f32.mrf.mxu0
    %v180 = vadd.f32 %v75, %v179
    %181 = vmatmul.f32.gmra.mxu0 %v101
    %v182 = vpop.f32.mrf.mxu0
    %v183 = vadd.f32 %v75, %v182
    %184 = vdwg.mxu0
    %v185 = vsel %vm38, %v121, %v142
    %v186 = vsel %vm39, %v162, %v183
    %v187 = vxor.u32 %v185, 2147483648
    %v188 = vxor.u32 %v186, 2147483648
    %v189 = vmul.f32 %v187, 1.442695
    %v190 = vpow.pop %v189
    %v191 = vmul.f32 %v188, 1.442695
    %v192 = vpow.pop %v191
    %v193 = vadd.f32 %v190, 1.0
    %v194 = vadd.f32 %v192, 1.0
    %v195 = vrcp.pop %v193
    %v196 = vmul.f32 %v193, %v195
    %v197 = vsub.f32 1.0, %v196
    %v198 = vmul.f32 %v195, %v197
    %v199 = vadd.f32 %v195, %v198
    %vm200 = vweird.f32 %v193
    %vm201 = vweird.f32 %v195
    %vm202 = vmor %vm200, %vm201
    %v203 = vsel %vm202, %v195, %v199
    %v204 = vand.u32 2147483647, %v193
    %vm205 = vcmp.eq.f32.partialorder %v204, 8.507059e+37
    %v206 = vand.u32 %v193, 2147483648
    %v207 = vor.u32 1.1754944e-38, %v206
    %v208 = vsel %vm205, %v207, %v203
    %v209 = vmul.f32 1.0, %v208
    %v210 = vrcp.pop %v194
    %v211 = vmul.f32 %v194, %v210
    %v212 = vsub.f32 1.0, %v211
    %v213 = vmul.f32 %v210, %v212
    %v214 = vadd.f32 %v210, %v213
    %vm215 = vweird.f32 %v194
    %vm216 = vweird.f32 %v210
    %vm217 = vmor %vm215, %vm216
    %v218 = vsel %vm217, %v210, %v214
    %v219 = vand.u32 2147483647, %v194
    %vm220 = vcmp.eq.f32.partialorder %v219, 8.507059e+37
    %v221 = vand.u32 %v194, 2147483648
    %v222 = vor.u32 1.1754944e-38, %v221
    %v223 = vsel %vm220, %v222, %v218
    %v224 = vmul.f32 1.0, %v223
    %v225 = vtanh.pop %v186
    %v226 = vmul.f32 %v209, 0.0
    %v227 = vmul.f32 %v209, %v225
    %229 = vrot.lane.b32.xlu0 %v227, 64
    %v230 = vpop.permute.xlu0 %229
    %v232 = vadd.f32 %v226, %v230
    %v233 = vtanh.pop %v232
    %v234 = vmul.f32 %v224, %v233
    %236 = vrot.lane.b32.xlu0 %v234, 64
    %v237 = vpop.permute.xlu0 %236
    %vm239 = vcmask 261120
    %240 = vst.msk [vmem:[#allocation2] sm:$0xff] %vm239, %v237
    %vm241 = vcmask 523520
    %242 = vst.msk [vmem:[#allocation2 + $0x38] sm:$0xff] %vm241, %v237
    %v243 = vsel %vm38, %v124, %v139
    %v244 = vsel %vm39, %v165, %v180
    %vm245 = vcmask 523264
    %v246 = vsel %vm245, %v237, 0
    %248 = vmatpush.msra.mxu0 0.0
    %249 = vmatpush.msra.mxu0 0.0
    %250 = vmatpush.msra.mxu0 0.0
    %251 = vmatpush.msra.mxu0 0.0
    %252 = vmatpush.msra.mxu0 0.0
    %253 = vmatpush.msra.mxu0 0.0
    %254 = vmatpush.msra.mxu0 0.0
    %255 = vmatpush.msra.mxu0 0.0
    %256 = vmatpush.msra.mxu0 %v61
    %257 = vmatpush.msra.mxu0 %v59
    %258 = vmatpush.msra.mxu0 %v57
    %259 = vmatpush.msra.mxu0 %v55
    %260 = vmatpush.msra.mxu0 %v53
    %261 = vmatpush.msra.mxu0 %v51
    %262 = vmatpush.msra.mxu0 %v49
    %263 = vmatpush.msra.mxu0 %v47
    %264 = vmatmul.f32.gmra.mxu0 %v246
    %v265 = vpop.f32.mrf.mxu0
    %v266 = vadd.f32 0.0, %v265
    %267 = vdwg.mxu0
    %268 = vmatpush.msra.mxu0 0.0
    %269 = vmatpush.msra.mxu0 0.0
    %270 = vmatpush.msra.mxu0 0.0
    %271 = vmatpush.msra.mxu0 0.0
    %272 = vmatpush.msra.mxu0 0.0
    %273 = vmatpush.msra.mxu0 0.0
    %274 = vmatpush.msra.mxu0 0.0
    %275 = vmatpush.msra.mxu0 0.0
    %276 = vmatpush.msra.mxu0 %v62
    %277 = vmatpush.msra.mxu0 %v60
    %278 = vmatpush.msra.mxu0 %v58
    %279 = vmatpush.msra.mxu0 %v56
    %280 = vmatpush.msra.mxu0 %v54
    %281 = vmatpush.msra.mxu0 %v52
    %282 = vmatpush.msra.mxu0 %v50
    %283 = vmatpush.msra.mxu0 %v48
    %284 = vmatmul.f32.gmra.mxu0 %v246
    %v285 = vpop.f32.mrf.mxu0
    %v286 = vadd.f32 0.0, %v285
    %287 = vdwg.mxu0
    %v288 = vadd.f32 %v243, %v266
    %v289 = vadd.f32 %v244, %v286
    %v290 = vxor.u32 %v288, 2147483648
    %v291 = vxor.u32 %v289, 2147483648
    %v292 = vmul.f32 %v290, 1.442695
    %v293 = vpow.pop %v292
    %v294 = vmul.f32 %v291, 1.442695
    %v295 = vpow.pop %v294
    %v296 = vadd.f32 %v293, 1.0
    %v297 = vadd.f32 %v295, 1.0
    %v298 = vrcp.pop %v296
    %v299 = vmul.f32 %v296, %v298
    %v300 = vsub.f32 1.0, %v299
    %v301 = vmul.f32 %v298, %v300
    %v302 = vadd.f32 %v298, %v301
    %vm303 = vweird.f32 %v296
    %vm304 = vweird.f32 %v298
    %vm305 = vmor %vm303, %vm304
    %v306 = vsel %vm305, %v298, %v302
    %v307 = vand.u32 2147483647, %v296
    %vm308 = vcmp.eq.f32.partialorder %v307, 8.507059e+37
    %v309 = vand.u32 %v296, 2147483648
    %v310 = vor.u32 1.1754944e-38, %v309
    %v311 = vsel %vm308, %v310, %v306
    %v312 = vmul.f32 1.0, %v311
    %v313 = vrcp.pop %v297
    %v314 = vmul.f32 %v297, %v313
    %v315 = vsub.f32 1.0, %v314
    %v316 = vmul.f32 %v313, %v315
    %v317 = vadd.f32 %v313, %v316
    %vm318 = vweird.f32 %v297
    %vm319 = vweird.f32 %v313
    %vm320 = vmor %vm318, %vm319
    %v321 = vsel %vm320, %v313, %v317
    %v322 = vand.u32 2147483647, %v297
    %vm323 = vcmp.eq.f32.partialorder %v322, 8.507059e+37
    %v324 = vand.u32 %v297, 2147483648
    %v325 = vor.u32 1.1754944e-38, %v324
    %v326 = vsel %vm323, %v325, %v321
    %v327 = vmul.f32 1.0, %v326
    %v328 = vtanh.pop %v289
    %v329 = vmul.f32 %v312, %v232
    %v330 = vmul.f32 %v312, %v328
    %332 = vrot.lane.b32.xlu0 %v330, 64
    %v333 = vpop.permute.xlu0 %332
    %v335 = vadd.f32 %v329, %v333
    %v336 = vtanh.pop %v335
    %v337 = vmul.f32 %v327, %v336
    %339 = vrot.lane.b32.xlu0 %v337, 64
    %v340 = vpop.permute.xlu0 %339
    %342 = vst.msk [vmem:[#allocation2 + $0x8] sm:$0xff] %vm239, %v340
    %343 = vst.msk [vmem:[#allocation2 + $0x30] sm:$0xff] %vm241, %v340
    %v344 = vsel %vm38, %v127, %v136
    %v345 = vsel %vm39, %v168, %v177
    %v346 = vsel %vm245, %v340, 0
    %348 = vmatpush.msra.mxu0 0.0
    %349 = vmatpush.msra.mxu0 0.0
    %350 = vmatpush.msra.mxu0 0.0
    %351 = vmatpush.msra.mxu0 0.0
    %352 = vmatpush.msra.mxu0 0.0
    %353 = vmatpush.msra.mxu0 0.0
    %354 = vmatpush.msra.mxu0 0.0
    %355 = vmatpush.msra.mxu0 0.0
    %356 = vmatpush.msra.mxu0 %v61
    %357 = vmatpush.msra.mxu0 %v59
    %358 = vmatpush.msra.mxu0 %v57
    %359 = vmatpush.msra.mxu0 %v55
    %360 = vmatpush.msra.mxu0 %v53
    %361 = vmatpush.msra.mxu0 %v51
    %362 = vmatpush.msra.mxu0 %v49
    %363 = vmatpush.msra.mxu0 %v47
    %364 = vmatmul.f32.gmra.mxu0 %v346
    %v365 = vpop.f32.mrf.mxu0
    %v366 = vadd.f32 0.0, %v365
    %367 = vdwg.mxu0
    %368 = vmatpush.msra.mxu0 0.0
    %369 = vmatpush.msra.mxu0 0.0
    %370 = vmatpush.msra.mxu0 0.0
    %371 = vmatpush.msra.mxu0 0.0
    %372 = vmatpush.msra.mxu0 0.0
    %373 = vmatpush.msra.mxu0 0.0
    %374 = vmatpush.msra.mxu0 0.0
    %375 = vmatpush.msra.mxu0 0.0
    %376 = vmatpush.msra.mxu0 %v62
    %377 = vmatpush.msra.mxu0 %v60
    %378 = vmatpush.msra.mxu0 %v58
    %379 = vmatpush.msra.mxu0 %v56
    %380 = vmatpush.msra.mxu0 %v54
    %381 = vmatpush.msra.mxu0 %v52
    %382 = vmatpush.msra.mxu0 %v50
    %383 = vmatpush.msra.mxu0 %v48
    %384 = vmatmul.f32.gmra.mxu0 %v346
    %v385 = vpop.f32.mrf.mxu0
    %v386 = vadd.f32 0.0, %v385
    %387 = vdwg.mxu0
    %v388 = vadd.f32 %v344, %v366
    %v389 = vadd.f32 %v345, %v386
    %v390 = vxor.u32 %v388, 2147483648
    %v391 = vxor.u32 %v389, 2147483648
    %v392 = vmul.f32 %v390, 1.442695
    %v393 = vpow.pop %v392
    %v394 = vmul.f32 %v391, 1.442695
    %v395 = vpow.pop %v394
    %v396 = vadd.f32 %v393, 1.0
    %v397 = vadd.f32 %v395, 1.0
    %v398 = vrcp.pop %v396
    %v399 = vmul.f32 %v396, %v398
    %v400 = vsub.f32 1.0, %v399
    %v401 = vmul.f32 %v398, %v400
    %v402 = vadd.f32 %v398, %v401
    %vm403 = vweird.f32 %v396
    %vm404 = vweird.f32 %v398
    %vm405 = vmor %vm403, %vm404
    %v406 = vsel %vm405, %v398, %v402
    %v407 = vand.u32 2147483647, %v396
    %vm408 = vcmp.eq.f32.partialorder %v407, 8.507059e+37
    %v409 = vand.u32 %v396, 2147483648
    %v410 = vor.u32 1.1754944e-38, %v409
    %v411 = vsel %vm408, %v410, %v406
    %v412 = vmul.f32 1.0, %v411
    %v413 = vrcp.pop %v397
    %v414 = vmul.f32 %v397, %v413
    %v415 = vsub.f32 1.0, %v414
    %v416 = vmul.f32 %v413, %v415
    %v417 = vadd.f32 %v413, %v416
    %vm418 = vweird.f32 %v397
    %vm419 = vweird.f32 %v413
    %vm420 = vmor %vm418, %vm419
    %v421 = vsel %vm420, %v413, %v417
    %v422 = vand.u32 2147483647, %v397
    %vm423 = vcmp.eq.f32.partialorder %v422, 8.507059e+37
    %v424 = vand.u32 %v397, 2147483648
    %v425 = vor.u32 1.1754944e-38, %v424
    %v426 = vsel %vm423, %v425, %v421
    %v427 = vmul.f32 1.0, %v426
    %v428 = vtanh.pop %v389
    %v429 = vmul.f32 %v412, %v335
    %v430 = vmul.f32 %v412, %v428
    %432 = vrot.lane.b32.xlu0 %v430, 64
    %v433 = vpop.permute.xlu0 %432
    %v435 = vadd.f32 %v429, %v433
    %v436 = vtanh.pop %v435
    %v437 = vmul.f32 %v427, %v436
    %439 = vrot.lane.b32.xlu0 %v437, 64
    %v440 = vpop.permute.xlu0 %439
    %442 = vst.msk [vmem:[#allocation2 + $0x10] sm:$0xff] %vm239, %v440
    %443 = vst.msk [vmem:[#allocation2 + $0x28] sm:$0xff] %vm241, %v440
    %v444 = vsel %vm38, %v130, %v133
    %v445 = vsel %vm39, %v171, %v174
    %v446 = vsel %vm245, %v440, 0
    %448 = vmatpush.msra.mxu0 0.0
    %449 = vmatpush.msra.mxu0 0.0
    %450 = vmatpush.msra.mxu0 0.0
    %451 = vmatpush.msra.mxu0 0.0
    %452 = vmatpush.msra.mxu0 0.0
    %453 = vmatpush.msra.mxu0 0.0
    %454 = vmatpush.msra.mxu0 0.0
    %455 = vmatpush.msra.mxu0 0.0
    %456 = vmatpush.msra.mxu0 %v61
    %457 = vmatpush.msra.mxu0 %v59
    %458 = vmatpush.msra.mxu0 %v57
    %459 = vmatpush.msra.mxu0 %v55
    %460 = vmatpush.msra.mxu0 %v53
    %461 = vmatpush.msra.mxu0 %v51
    %462 = vmatpush.msra.mxu0 %v49
    %463 = vmatpush.msra.mxu0 %v47
    %464 = vmatmul.f32.gmra.mxu0 %v446
    %v465 = vpop.f32.mrf.mxu0
    %v466 = vadd.f32 0.0, %v465
    %467 = vdwg.mxu0
    %468 = vmatpush.msra.mxu0 0.0
    %469 = vmatpush.msra.mxu0 0.0
    %470 = vmatpush.msra.mxu0 0.0
    %471 = vmatpush.msra.mxu0 0.0
    %472 = vmatpush.msra.mxu0 0.0
    %473 = vmatpush.msra.mxu0 0.0
    %474 = vmatpush.msra.mxu0 0.0
    %475 = vmatpush.msra.mxu0 0.0
    %476 = vmatpush.msra.mxu0 %v62
    %477 = vmatpush.msra.mxu0 %v60
    %478 = vmatpush.msra.mxu0 %v58
    %479 = vmatpush.msra.mxu0 %v56
    %480 = vmatpush.msra.mxu0 %v54
    %481 = vmatpush.msra.mxu0 %v52
    %482 = vmatpush.msra.mxu0 %v50
    %483 = vmatpush.msra.mxu0 %v48
    %484 = vmatmul.f32.gmra.mxu0 %v446
    %v485 = vpop.f32.mrf.mxu0
    %v486 = vadd.f32 0.0, %v485
    %487 = vdwg.mxu0
    %v488 = vadd.f32 %v444, %v466
    %v489 = vadd.f32 %v445, %v486
    %v490 = vxor.u32 %v488, 2147483648
    %v491 = vxor.u32 %v489, 2147483648
    %v492 = vmul.f32 %v490, 1.442695
    %v493 = vpow.pop %v492
    %v494 = vmul.f32 %v491, 1.442695
    %v495 = vpow.pop %v494
    %v496 = vadd.f32 %v493, 1.0
    %v497 = vadd.f32 %v495, 1.0
    %v498 = vrcp.pop %v496
    %v499 = vmul.f32 %v496, %v498
    %v500 = vsub.f32 1.0, %v499
    %v501 = vmul.f32 %v498, %v500
    %v502 = vadd.f32 %v498, %v501
    %vm503 = vweird.f32 %v496
    %vm504 = vweird.f32 %v498
    %vm505 = vmor %vm503, %vm504
    %v506 = vsel %vm505, %v498, %v502
    %v507 = vand.u32 2147483647, %v496
    %vm508 = vcmp.eq.f32.partialorder %v507, 8.507059e+37
    %v509 = vand.u32 %v496, 2147483648
    %v510 = vor.u32 1.1754944e-38, %v509
    %v511 = vsel %vm508, %v510, %v506
    %v512 = vmul.f32 1.0, %v511
    %v513 = vrcp.pop %v497
    %v514 = vmul.f32 %v497, %v513
    %v515 = vsub.f32 1.0, %v514
    %v516 = vmul.f32 %v513, %v515
    %v517 = vadd.f32 %v513, %v516
    %vm518 = vweird.f32 %v497
    %vm519 = vweird.f32 %v513
    %vm520 = vmor %vm518, %vm519
    %v521 = vsel %vm520, %v513, %v517
    %v522 = vand.u32 2147483647, %v497
    %vm523 = vcmp.eq.f32.partialorder %v522, 8.507059e+37
    %v524 = vand.u32 %v497, 2147483648
    %v525 = vor.u32 1.1754944e-38, %v524
    %v526 = vsel %vm523, %v525, %v521
    %v527 = vmul.f32 1.0, %v526
    %v528 = vtanh.pop %v489
    %v529 = vmul.f32 %v512, %v435
    %v530 = vmul.f32 %v512, %v528
    %532 = vrot.lane.b32.xlu0 %v530, 64
    %v533 = vpop.permute.xlu0 %532
    %v535 = vadd.f32 %v529, %v533
    %v536 = vtanh.pop %v535
    %v537 = vmul.f32 %v527, %v536
    %539 = vrot.lane.b32.xlu0 %v537, 64
    %v540 = vpop.permute.xlu0 %539
    %542 = vst.msk [vmem:[#allocation2 + $0x18] sm:$0xff] %vm239, %v540
    %543 = vst.msk [vmem:[#allocation2 + $0x20] sm:$0xff] %vm241, %v540
    %v544 = vsel %vm38, %v133, %v130
    %v545 = vsel %vm39, %v174, %v171
    %v546 = vsel %vm245, %v540, 0
    %548 = vmatpush.msra.mxu0 0.0
    %549 = vmatpush.msra.mxu0 0.0
    %550 = vmatpush.msra.mxu0 0.0
    %551 = vmatpush.msra.mxu0 0.0
    %552 = vmatpush.msra.mxu0 0.0
    %553 = vmatpush.msra.mxu0 0.0
    %554 = vmatpush.msra.mxu0 0.0
    %555 = vmatpush.msra.mxu0 0.0
    %556 = vmatpush.msra.mxu0 %v61
    %557 = vmatpush.msra.mxu0 %v59
    %558 = vmatpush.msra.mxu0 %v57
    %559 = vmatpush.msra.mxu0 %v55
    %560 = vmatpush.msra.mxu0 %v53
    %561 = vmatpush.msra.mxu0 %v51
    %562 = vmatpush.msra.mxu0 %v49
    %563 = vmatpush.msra.mxu0 %v47
    %564 = vmatmul.f32.gmra.mxu0 %v546
    %v565 = vpop.f32.mrf.mxu0
    %v566 = vadd.f32 0.0, %v565
    %567 = vdwg.mxu0
    %568 = vmatpush.msra.mxu0 0.0
    %569 = vmatpush.msra.mxu0 0.0
    %570 = vmatpush.msra.mxu0 0.0
    %571 = vmatpush.msra.mxu0 0.0
    %572 = vmatpush.msra.mxu0 0.0
    %573 = vmatpush.msra.mxu0 0.0
    %574 = vmatpush.msra.mxu0 0.0
    %575 = vmatpush.msra.mxu0 0.0
    %576 = vmatpush.msra.mxu0 %v62
    %577 = vmatpush.msra.mxu0 %v60
    %578 = vmatpush.msra.mxu0 %v58
    %579 = vmatpush.msra.mxu0 %v56
    %580 = vmatpush.msra.mxu0 %v54
    %581 = vmatpush.msra.mxu0 %v52
    %582 = vmatpush.msra.mxu0 %v50
    %583 = vmatpush.msra.mxu0 %v48
    %584 = vmatmul.f32.gmra.mxu0 %v546
    %v585 = vpop.f32.mrf.mxu0
    %v586 = vadd.f32 0.0, %v585
    %587 = vdwg.mxu0
    %v588 = vadd.f32 %v544, %v566
    %v589 = vadd.f32 %v545, %v586
    %v590 = vxor.u32 %v588, 2147483648
    %v591 = vxor.u32 %v589, 2147483648
    %v592 = vmul.f32 %v590, 1.442695
    %v593 = vpow.pop %v592
    %v594 = vmul.f32 %v591, 1.442695
    %v595 = vpow.pop %v594
    %v596 = vadd.f32 %v593, 1.0
    %v597 = vadd.f32 %v595, 1.0
    %v598 = vrcp.pop %v596
    %v599 = vmul.f32 %v596, %v598
    %v600 = vsub.f32 1.0, %v599
    %v601 = vmul.f32 %v598, %v600
    %v602 = vadd.f32 %v598, %v601
    %vm603 = vweird.f32 %v596
    %vm604 = vweird.f32 %v598
    %vm605 = vmor %vm603, %vm604
    %v606 = vsel %vm605, %v598, %v602
    %v607 = vand.u32 2147483647, %v596
    %vm608 = vcmp.eq.f32.partialorder %v607, 8.507059e+37
    %v609 = vand.u32 %v596, 2147483648
    %v610 = vor.u32 1.1754944e-38, %v609
    %v611 = vsel %vm608, %v610, %v606
    %v612 = vmul.f32 1.0, %v611
    %v613 = vrcp.pop %v597
    %v614 = vmul.f32 %v597, %v613
    %v615 = vsub.f32 1.0, %v614
    %v616 = vmul.f32 %v613, %v615
    %v617 = vadd.f32 %v613, %v616
    %vm618 = vweird.f32 %v597
    %vm619 = vweird.f32 %v613
    %vm620 = vmor %vm618, %vm619
    %v621 = vsel %vm620, %v613, %v617
    %v622 = vand.u32 2147483647, %v597
    %vm623 = vcmp.eq.f32.partialorder %v622, 8.507059e+37
    %v624 = vand.u32 %v597, 2147483648
    %v625 = vor.u32 1.1754944e-38, %v624
    %v626 = vsel %vm623, %v625, %v621
    %v627 = vmul.f32 1.0, %v626
    %v628 = vtanh.pop %v589
    %v629 = vmul.f32 %v612, %v535
    %v630 = vmul.f32 %v612, %v628
    %632 = vrot.lane.b32.xlu0 %v630, 64
    %v633 = vpop.permute.xlu0 %632
    %v635 = vadd.f32 %v629, %v633
    %v636 = vtanh.pop %v635
    %v637 = vmul.f32 %v627, %v636
    %639 = vrot.lane.b32.xlu0 %v637, 64
    %v640 = vpop.permute.xlu0 %639
    %642 = vst.msk [vmem:[#allocation2 + $0x20] sm:$0xff] %vm239, %v640
    %643 = vst.msk [vmem:[#allocation2 + $0x18] sm:$0xff] %vm241, %v640
    %v644 = vsel %vm38, %v136, %v127
    %v645 = vsel %vm39, %v177, %v168
    %v646 = vsel %vm245, %v640, 0
    %648 = vmatpush.msra.mxu0 0.0
    %649 = vmatpush.msra.mxu0 0.0
    %650 = vmatpush.msra.mxu0 0.0
    %651 = vmatpush.msra.mxu0 0.0
    %652 = vmatpush.msra.mxu0 0.0
    %653 = vmatpush.msra.mxu0 0.0
    %654 = vmatpush.msra.mxu0 0.0
    %655 = vmatpush.msra.mxu0 0.0
    %656 = vmatpush.msra.mxu0 %v61
    %657 = vmatpush.msra.mxu0 %v59
    %658 = vmatpush.msra.mxu0 %v57
    %659 = vmatpush.msra.mxu0 %v55
    %660 = vmatpush.msra.mxu0 %v53
    %661 = vmatpush.msra.mxu0 %v51
    %662 = vmatpush.msra.mxu0 %v49
    %663 = vmatpush.msra.mxu0 %v47
    %664 = vmatmul.f32.gmra.mxu0 %v646
    %v665 = vpop.f32.mrf.mxu0
    %v666 = vadd.f32 0.0, %v665
    %667 = vdwg.mxu0
    %668 = vmatpush.msra.mxu0 0.0
    %669 = vmatpush.msra.mxu0 0.0
    %670 = vmatpush.msra.mxu0 0.0
    %671 = vmatpush.msra.mxu0 0.0
    %672 = vmatpush.msra.mxu0 0.0
    %673 = vmatpush.msra.mxu0 0.0
    %674 = vmatpush.msra.mxu0 0.0
    %675 = vmatpush.msra.mxu0 0.0
    %676 = vmatpush.msra.mxu0 %v62
    %677 = vmatpush.msra.mxu0 %v60
    %678 = vmatpush.msra.mxu0 %v58
    %679 = vmatpush.msra.mxu0 %v56
    %680 = vmatpush.msra.mxu0 %v54
    %681 = vmatpush.msra.mxu0 %v52
    %682 = vmatpush.msra.mxu0 %v50
    %683 = vmatpush.msra.mxu0 %v48
    %684 = vmatmul.f32.gmra.mxu0 %v646
    %v685 = vpop.f32.mrf.mxu0
    %v686 = vadd.f32 0.0, %v685
    %687 = vdwg.mxu0
    %v688 = vadd.f32 %v644, %v666
    %v689 = vadd.f32 %v645, %v686
    %v690 = vxor.u32 %v688, 2147483648
    %v691 = vxor.u32 %v689, 2147483648
    %v692 = vmul.f32 %v690, 1.442695
    %v693 = vpow.pop %v692
    %v694 = vmul.f32 %v691, 1.442695
    %v695 = vpow.pop %v694
    %v696 = vadd.f32 %v693, 1.0
    %v697 = vadd.f32 %v695, 1.0
    %v698 = vrcp.pop %v696
    %v699 = vmul.f32 %v696, %v698
    %v700 = vsub.f32 1.0, %v699
    %v701 = vmul.f32 %v698, %v700
    %v702 = vadd.f32 %v698, %v701
    %vm703 = vweird.f32 %v696
    %vm704 = vweird.f32 %v698
    %vm705 = vmor %vm703, %vm704
    %v706 = vsel %vm705, %v698, %v702
    %v707 = vand.u32 2147483647, %v696
    %vm708 = vcmp.eq.f32.partialorder %v707, 8.507059e+37
    %v709 = vand.u32 %v696, 2147483648
    %v710 = vor.u32 1.1754944e-38, %v709
    %v711 = vsel %vm708, %v710, %v706
    %v712 = vmul.f32 1.0, %v711
    %v713 = vrcp.pop %v697
    %v714 = vmul.f32 %v697, %v713
    %v715 = vsub.f32 1.0, %v714
    %v716 = vmul.f32 %v713, %v715
    %v717 = vadd.f32 %v713, %v716
    %vm718 = vweird.f32 %v697
    %vm719 = vweird.f32 %v713
    %vm720 = vmor %vm718, %vm719
    %v721 = vsel %vm720, %v713, %v717
    %v722 = vand.u32 2147483647, %v697
    %vm723 = vcmp.eq.f32.partialorder %v722, 8.507059e+37
    %v724 = vand.u32 %v697, 2147483648
    %v725 = vor.u32 1.1754944e-38, %v724
    %v726 = vsel %vm723, %v725, %v721
    %v727 = vmul.f32 1.0, %v726
    %v728 = vtanh.pop %v689
    %v729 = vmul.f32 %v712, %v635
    %v730 = vmul.f32 %v712, %v728
    %732 = vrot.lane.b32.xlu0 %v730, 64
    %v733 = vpop.permute.xlu0 %732
    %v735 = vadd.f32 %v729, %v733
    %v736 = vtanh.pop %v735
    %v737 = vmul.f32 %v727, %v736
    %739 = vrot.lane.b32.xlu0 %v737, 64
    %v740 = vpop.permute.xlu0 %739
    %742 = vst.msk [vmem:[#allocation2 + $0x28] sm:$0xff] %vm239, %v740
    %743 = vst.msk [vmem:[#allocation2 + $0x10] sm:$0xff] %vm241, %v740
    %v744 = vsel %vm38, %v139, %v124
    %v745 = vsel %vm39, %v180, %v165
    %v746 = vsel %vm245, %v740, 0
    %748 = vmatpush.msra.mxu0 0.0
    %749 = vmatpush.msra.mxu0 0.0
    %750 = vmatpush.msra.mxu0 0.0
    %751 = vmatpush.msra.mxu0 0.0
    %752 = vmatpush.msra.mxu0 0.0
    %753 = vmatpush.msra.mxu0 0.0
    %754 = vmatpush.msra.mxu0 0.0
    %755 = vmatpush.msra.mxu0 0.0
    %756 = vmatpush.msra.mxu0 %v61
    %757 = vmatpush.msra.mxu0 %v59
    %758 = vmatpush.msra.mxu0 %v57
    %759 = vmatpush.msra.mxu0 %v55
    %760 = vmatpush.msra.mxu0 %v53
    %761 = vmatpush.msra.mxu0 %v51
    %762 = vmatpush.msra.mxu0 %v49
    %763 = vmatpush.msra.mxu0 %v47
    %764 = vmatmul.f32.gmra.mxu0 %v746
    %v765 = vpop.f32.mrf.mxu0
    %v766 = vadd.f32 0.0, %v765
    %767 = vdwg.mxu0
    %768 = vmatpush.msra.mxu0 0.0
    %769 = vmatpush.msra.mxu0 0.0
    %770 = vmatpush.msra.mxu0 0.0
    %771 = vmatpush.msra.mxu0 0.0
    %772 = vmatpush.msra.mxu0 0.0
    %773 = vmatpush.msra.mxu0 0.0
    %774 = vmatpush.msra.mxu0 0.0
    %775 = vmatpush.msra.mxu0 0.0
    %776 = vmatpush.msra.mxu0 %v62
    %777 = vmatpush.msra.mxu0 %v60
    %778 = vmatpush.msra.mxu0 %v58
    %779 = vmatpush.msra.mxu0 %v56
    %780 = vmatpush.msra.mxu0 %v54
    %781 = vmatpush.msra.mxu0 %v52
    %782 = vmatpush.msra.mxu0 %v50
    %783 = vmatpush.msra.mxu0 %v48
    %784 = vmatmul.f32.gmra.mxu0 %v746
    %v785 = vpop.f32.mrf.mxu0
    %v786 = vadd.f32 0.0, %v785
    %787 = vdwg.mxu0
    %v788 = vadd.f32 %v744, %v766
    %v789 = vadd.f32 %v745, %v786
    %v790 = vxor.u32 %v788, 2147483648
    %v791 = vxor.u32 %v789, 2147483648
    %v792 = vmul.f32 %v790, 1.442695
    %v793 = vpow.pop %v792
    %v794 = vmul.f32 %v791, 1.442695
    %v795 = vpow.pop %v794
    %v796 = vadd.f32 %v793, 1.0
    %v797 = vadd.f32 %v795, 1.0
    %v798 = vrcp.pop %v796
    %v799 = vmul.f32 %v796, %v798
    %v800 = vsub.f32 1.0, %v799
    %v801 = vmul.f32 %v798, %v800
    %v802 = vadd.f32 %v798, %v801
    %vm803 = vweird.f32 %v796
    %vm804 = vweird.f32 %v798
    %vm805 = vmor %vm803, %vm804
    %v806 = vsel %vm805, %v798, %v802
    %v807 = vand.u32 2147483647, %v796
    %vm808 = vcmp.eq.f32.partialorder %v807, 8.507059e+37
    %v809 = vand.u32 %v796, 2147483648
    %v810 = vor.u32 1.1754944e-38, %v809
    %v811 = vsel %vm808, %v810, %v806
    %v812 = vmul.f32 1.0, %v811
    %v813 = vrcp.pop %v797
    %v814 = vmul.f32 %v797, %v813
    %v815 = vsub.f32 1.0, %v814
    %v816 = vmul.f32 %v813, %v815
    %v817 = vadd.f32 %v813, %v816
    %vm818 = vweird.f32 %v797
    %vm819 = vweird.f32 %v813
    %vm820 = vmor %vm818, %vm819
    %v821 = vsel %vm820, %v813, %v817
    %v822 = vand.u32 2147483647, %v797
    %vm823 = vcmp.eq.f32.partialorder %v822, 8.507059e+37
    %v824 = vand.u32 %v797, 2147483648
    %v825 = vor.u32 1.1754944e-38, %v824
    %v826 = vsel %vm823, %v825, %v821
    %v827 = vmul.f32 1.0, %v826
    %v828 = vtanh.pop %v789
    %v829 = vmul.f32 %v812, %v735
    %v830 = vmul.f32 %v812, %v828
    %832 = vrot.lane.b32.xlu0 %v830, 64
    %v833 = vpop.permute.xlu0 %832
    %v835 = vadd.f32 %v829, %v833
    %v836 = vtanh.pop %v835
    %v837 = vmul.f32 %v827, %v836
    %839 = vrot.lane.b32.xlu0 %v837, 64
    %v840 = vpop.permute.xlu0 %839
    %842 = vst.msk [vmem:[#allocation2 + $0x30] sm:$0xff] %vm239, %v840
    %843 = vst.msk [vmem:[#allocation2 + $0x8] sm:$0xff] %vm241, %v840
    %v844 = vsel %vm38, %v142, %v121
    %v845 = vsel %vm39, %v183, %v162
    %v846 = vsel %vm245, %v840, 0
    %848 = vmatpush.msra.mxu0 0.0
    %849 = vmatpush.msra.mxu0 0.0
    %850 = vmatpush.msra.mxu0 0.0
    %851 = vmatpush.msra.mxu0 0.0
    %852 = vmatpush.msra.mxu0 0.0
    %853 = vmatpush.msra.mxu0 0.0
    %854 = vmatpush.msra.mxu0 0.0
    %855 = vmatpush.msra.mxu0 0.0
    %856 = vmatpush.msra.mxu0 %v61
    %857 = vmatpush.msra.mxu0 %v59
    %858 = vmatpush.msra.mxu0 %v57
    %859 = vmatpush.msra.mxu0 %v55
    %860 = vmatpush.msra.mxu0 %v53
    %861 = vmatpush.msra.mxu0 %v51
    %862 = vmatpush.msra.mxu0 %v49
    %863 = vmatpush.msra.mxu0 %v47
    %864 = vmatmul.f32.gmra.mxu0 %v846
    %v865 = vpop.f32.mrf.mxu0
    %v866 = vadd.f32 0.0, %v865
    %867 = vdwg.mxu0
    %868 = vmatpush.msra.mxu0 0.0
    %869 = vmatpush.msra.mxu0 0.0
    %870 = vmatpush.msra.mxu0 0.0
    %871 = vmatpush.msra.mxu0 0.0
    %872 = vmatpush.msra.mxu0 0.0
    %873 = vmatpush.msra.mxu0 0.0
    %874 = vmatpush.msra.mxu0 0.0
    %875 = vmatpush.msra.mxu0 0.0
    %876 = vmatpush.msra.mxu0 %v62
    %877 = vmatpush.msra.mxu0 %v60
    %878 = vmatpush.msra.mxu0 %v58
    %879 = vmatpush.msra.mxu0 %v56
    %880 = vmatpush.msra.mxu0 %v54
    %881 = vmatpush.msra.mxu0 %v52
    %882 = vmatpush.msra.mxu0 %v50
    %883 = vmatpush.msra.mxu0 %v48
    %884 = vmatmul.f32.gmra.mxu0 %v846
    %v885 = vpop.f32.mrf.mxu0
    %v886 = vadd.f32 0.0, %v885
    %887 = vdwg.mxu0
    %v888 = vadd.f32 %v844, %v866
    %v889 = vadd.f32 %v845, %v886
    %v890 = vxor.u32 %v888, 2147483648
    %v891 = vxor.u32 %v889, 2147483648
    %v892 = vmul.f32 %v890, 1.442695
    %v893 = vpow.pop %v892
    %v894 = vmul.f32 %v891, 1.442695
    %v895 = vpow.pop %v894
    %v896 = vadd.f32 %v893, 1.0
    %v897 = vadd.f32 %v895, 1.0
    %v898 = vrcp.pop %v896
    %v899 = vmul.f32 %v896, %v898
    %v900 = vsub.f32 1.0, %v899
    %v901 = vmul.f32 %v898, %v900
    %v902 = vadd.f32 %v898, %v901
    %vm903 = vweird.f32 %v896
    %vm904 = vweird.f32 %v898
    %vm905 = vmor %vm903, %vm904
    %v906 = vsel %vm905, %v898, %v902
    %v907 = vand.u32 2147483647, %v896
    %vm908 = vcmp.eq.f32.partialorder %v907, 8.507059e+37
    %v909 = vand.u32 %v896, 2147483648
    %v910 = vor.u32 1.1754944e-38, %v909
    %v911 = vsel %vm908, %v910, %v906
    %v912 = vmul.f32 1.0, %v911
    %v913 = vrcp.pop %v897
    %v914 = vmul.f32 %v897, %v913
    %v915 = vsub.f32 1.0, %v914
    %v916 = vmul.f32 %v913, %v915
    %v917 = vadd.f32 %v913, %v916
    %vm918 = vweird.f32 %v897
    %vm919 = vweird.f32 %v913
    %vm920 = vmor %vm918, %vm919
    %v921 = vsel %vm920, %v913, %v917
    %v922 = vand.u32 2147483647, %v897
    %vm923 = vcmp.eq.f32.partialorder %v922, 8.507059e+37
    %v924 = vand.u32 %v897, 2147483648
    %v925 = vor.u32 1.1754944e-38, %v924
    %v926 = vsel %vm923, %v925, %v921
    %v927 = vmul.f32 1.0, %v926
    %v928 = vtanh.pop %v889
    %v929 = vmul.f32 %v912, %v835
    %v930 = vmul.f32 %v912, %v928
    %932 = vrot.lane.b32.xlu0 %v930, 64
    %v933 = vpop.permute.xlu0 %932
    %v935 = vadd.f32 %v929, %v933
    %v936 = vtanh.pop %v935
    %v937 = vmul.f32 %v927, %v936
    %939 = vrot.lane.b32.xlu0 %v937, 64
    %v940 = vpop.permute.xlu0 %939
    %942 = vst.msk [vmem:[#allocation2 + $0x38] sm:$0xff] %vm239, %v940
    %943 = vst.msk [vmem:[#allocation2] sm:$0xff] %vm241, %v940
    %v944 = vld [vmem:[%s2 + $0xc0] sm:$0xff]
    %v945 = vld [vmem:[%s2 + $0xc8] sm:$0xff]
    %v946 = vld [vmem:[%s2 + $0xd0] sm:$0xff]
    %v947 = vld [vmem:[%s2 + $0xd8] sm:$0xff]
    %v948 = vld [vmem:[%s2 + $0xe0] sm:$0xff]
    %v949 = vld [vmem:[%s2 + $0xe8] sm:$0xff]
    %v950 = vld [vmem:[%s2 + $0xf0] sm:$0xff]
    %v951 = vld [vmem:[%s2 + $0xf8] sm:$0xff]
    %v952 = vld [vmem:[%s2 + $0x100] sm:$0xff]
    %v953 = vld [vmem:[%s2 + $0x108] sm:$0xff]
    %v954 = vld [vmem:[%s2 + $0x110] sm:$0xff]
    %v955 = vld [vmem:[%s2 + $0x118] sm:$0xff]
    %v956 = vld [vmem:[%s2 + $0x120] sm:$0xff]
    %v957 = vld [vmem:[%s2 + $0x128] sm:$0xff]
    %v958 = vld [vmem:[%s2 + $0x130] sm:$0xff]
    %v959 = vld [vmem:[%s2 + $0x138] sm:$0xff]
    %v960 = vld [vmem:[%s2 + $0x140] sm:$0xff]
    %v961 = vld [vmem:[%s2 + $0x148] sm:$0xff]
    %v962 = vld [vmem:[%s2 + $0x150] sm:$0xff]
    %v963 = vld [vmem:[%s2 + $0x158] sm:$0xff]
    %v964 = vld [vmem:[%s2 + $0x160] sm:$0xff]
    %v965 = vld [vmem:[%s2 + $0x168] sm:$0xff]
    %v966 = vld [vmem:[%s2 + $0x170] sm:$0xff]
    %v967 = vld [vmem:[%s2 + $0x178] sm:$0xff]
    %v968 = vld [vmem:[%s2 + $0x180] sm:$0xff]
    %v969 = vld [vmem:[%s2 + $0x188] sm:$0xff]
    %v970 = vld [vmem:[%s2 + $0x190] sm:$0xff]
    %v971 = vld [vmem:[%s2 + $0x198] sm:$0xff]
    %v972 = vld [vmem:[%s2 + $0x1a0] sm:$0xff]
    %v973 = vld [vmem:[%s2 + $0x1a8] sm:$0xff]
    %v974 = vld [vmem:[%s2 + $0x1b0] sm:$0xff]
    %v975 = vld [vmem:[%s2 + $0x1b8] sm:$0xff]
    %s976 = scalar_lea.vmem %s2, 448
    %v977 = vld [vmem:[%s976] ss:$8 sm:$0x3]
    %v978 = vld [vmem:[#allocation2] sm:$0xff]
    %v979 = vld [vmem:[#allocation2 + $0x8] sm:$0xff]
    %v980 = vld [vmem:[#allocation2 + $0x10] sm:$0xff]
    %v981 = vld [vmem:[#allocation2 + $0x18] sm:$0xff]
    %v982 = vld [vmem:[#allocation2 + $0x20] sm:$0xff]
    %v983 = vld [vmem:[#allocation2 + $0x28] sm:$0xff]
    %v984 = vld [vmem:[#allocation2 + $0x30] sm:$0xff]
    %v985 = vld [vmem:[#allocation2 + $0x38] sm:$0xff]
    %v987 = vperm.slane %v977, 0
    %v988 = vperm.slane %v977, 1
    %v992 = vsel %vm245, %v978, 0
    %v995 = vsel %vm245, %v979, 0
    %v998 = vsel %vm245, %v980, 0
    %v1001 = vsel %vm245, %v981, 0
    %v1004 = vsel %vm245, %v982, 0
    %v1007 = vsel %vm245, %v983, 0
    %v1010 = vsel %vm245, %v984, 0
    %v1013 = vsel %vm245, %v985, 0
    %1015 = vmatpush.msra.mxu0 0.0
    %1016 = vmatpush.msra.mxu0 0.0
    %1017 = vmatpush.msra.mxu0 0.0
    %1018 = vmatpush.msra.mxu0 0.0
    %1019 = vmatpush.msra.mxu0 0.0
    %1020 = vmatpush.msra.mxu0 0.0
    %1021 = vmatpush.msra.mxu0 0.0
    %1022 = vmatpush.msra.mxu0 0.0
    %1023 = vmatpush.msra.mxu0 %v958
    %1024 = vmatpush.msra.mxu0 %v956
    %1025 = vmatpush.msra.mxu0 %v954
    %1026 = vmatpush.msra.mxu0 %v952
    %1027 = vmatpush.msra.mxu0 %v950
    %1028 = vmatpush.msra.mxu0 %v948
    %1029 = vmatpush.msra.mxu0 %v946
    %1030 = vmatpush.msra.mxu0 %v944
    %1031 = vmatmul.f32.gmra.mxu0 %v992
    %v1032 = vpop.f32.mrf.mxu0
    %v1033 = vadd.f32 %v987, %v1032
    %1034 = vmatmul.f32.gmra.mxu0 %v995
    %v1035 = vpop.f32.mrf.mxu0
    %v1036 = vadd.f32 %v987, %v1035
    %1037 = vmatmul.f32.gmra.mxu0 %v998
    %v1038 = vpop.f32.mrf.mxu0
    %v1039 = vadd.f32 %v987, %v1038
    %1040 = vmatmul.f32.gmra.mxu0 %v1001
    %v1041 = vpop.f32.mrf.mxu0
    %v1042 = vadd.f32 %v987, %v1041
    %1043 = vmatmul.f32.gmra.mxu0 %v1004
    %v1044 = vpop.f32.mrf.mxu0
    %v1045 = vadd.f32 %v987, %v1044
    %1046 = vmatmul.f32.gmra.mxu0 %v1007
    %v1047 = vpop.f32.mrf.mxu0
    %v1048 = vadd.f32 %v987, %v1047
    %1049 = vmatmul.f32.gmra.mxu0 %v1010
    %v1050 = vpop.f32.mrf.mxu0
    %v1051 = vadd.f32 %v987, %v1050
    %1052 = vmatmul.f32.gmra.mxu0 %v1013
    %v1053 = vpop.f32.mrf.mxu0
    %v1054 = vadd.f32 %v987, %v1053
    %1055 = vdwg.mxu0
    %1056 = vmatpush.msra.mxu0 0.0
    %1057 = vmatpush.msra.mxu0 0.0
    %1058 = vmatpush.msra.mxu0 0.0
    %1059 = vmatpush.msra.mxu0 0.0
    %1060 = vmatpush.msra.mxu0 0.0
    %1061 = vmatpush.msra.mxu0 0.0
    %1062 = vmatpush.msra.mxu0 0.0
    %1063 = vmatpush.msra.mxu0 0.0
    %1064 = vmatpush.msra.mxu0 %v959
    %1065 = vmatpush.msra.mxu0 %v957
    %1066 = vmatpush.msra.mxu0 %v955
    %1067 = vmatpush.msra.mxu0 %v953
    %1068 = vmatpush.msra.mxu0 %v951
    %1069 = vmatpush.msra.mxu0 %v949
    %1070 = vmatpush.msra.mxu0 %v947
    %1071 = vmatpush.msra.mxu0 %v945
    %1072 = vmatmul.f32.gmra.mxu0 %v992
    %v1073 = vpop.f32.mrf.mxu0
    %v1074 = vadd.f32 %v988, %v1073
    %1075 = vmatmul.f32.gmra.mxu0 %v995
    %v1076 = vpop.f32.mrf.mxu0
    %v1077 = vadd.f32 %v988, %v1076
    %1078 = vmatmul.f32.gmra.mxu0 %v998
    %v1079 = vpop.f32.mrf.mxu0
    %v1080 = vadd.f32 %v988, %v1079
    %1081 = vmatmul.f32.gmra.mxu0 %v1001
    %v1082 = vpop.f32.mrf.mxu0
    %v1083 = vadd.f32 %v988, %v1082
    %1084 = vmatmul.f32.gmra.mxu0 %v1004
    %v1085 = vpop.f32.mrf.mxu0
    %v1086 = vadd.f32 %v988, %v1085
    %1087 = vmatmul.f32.gmra.mxu0 %v1007
    %v1088 = vpop.f32.mrf.mxu0
    %v1089 = vadd.f32 %v988, %v1088
    %1090 = vmatmul.f32.gmra.mxu0 %v1010
    %v1091 = vpop.f32.mrf.mxu0
    %v1092 = vadd.f32 %v988, %v1091
    %1093 = vmatmul.f32.gmra.mxu0 %v1013
    %v1094 = vpop.f32.mrf.mxu0
    %v1095 = vadd.f32 %v988, %v1094
    %1096 = vdwg.mxu0
    %v1097 = vsel %vm38, %v1033, %v1054
    %v1098 = vsel %vm39, %v1074, %v1095
    %v1099 = vxor.u32 %v1097, 2147483648
    %v1100 = vxor.u32 %v1098, 2147483648
    %v1101 = vmul.f32 %v1099, 1.442695
    %v1102 = vpow.pop %v1101
    %v1103 = vmul.f32 %v1100, 1.442695
    %v1104 = vpow.pop %v1103
    %v1105 = vadd.f32 %v1102, 1.0
    %v1106 = vadd.f32 %v1104, 1.0
    %v1107 = vrcp.pop %v1105
    %v1108 = vmul.f32 %v1105, %v1107
    %v1109 = vsub.f32 1.0, %v1108
    %v1110 = vmul.f32 %v1107, %v1109
    %v1111 = vadd.f32 %v1107, %v1110
    %vm1112 = vweird.f32 %v1105
    %vm1113 = vweird.f32 %v1107
    %vm1114 = vmor %vm1112, %vm1113
    %v1115 = vsel %vm1114, %v1107, %v1111
    %v1116 = vand.u32 2147483647, %v1105
    %vm1117 = vcmp.eq.f32.partialorder %v1116, 8.507059e+37
    %v1118 = vand.u32 %v1105, 2147483648
    %v1119 = vor.u32 1.1754944e-38, %v1118
    %v1120 = vsel %vm1117, %v1119, %v1115
    %v1121 = vmul.f32 1.0, %v1120
    %v1122 = vrcp.pop %v1106
    %v1123 = vmul.f32 %v1106, %v1122
    %v1124 = vsub.f32 1.0, %v1123
    %v1125 = vmul.f32 %v1122, %v1124
    %v1126 = vadd.f32 %v1122, %v1125
    %vm1127 = vweird.f32 %v1106
    %vm1128 = vweird.f32 %v1122
    %vm1129 = vmor %vm1127, %vm1128
    %v1130 = vsel %vm1129, %v1122, %v1126
    %v1131 = vand.u32 2147483647, %v1106
    %vm1132 = vcmp.eq.f32.partialorder %v1131, 8.507059e+37
    %v1133 = vand.u32 %v1106, 2147483648
    %v1134 = vor.u32 1.1754944e-38, %v1133
    %v1135 = vsel %vm1132, %v1134, %v1130
    %v1136 = vmul.f32 1.0, %v1135
    %v1137 = vtanh.pop %v1098
    %v1138 = vmul.f32 %v1121, 0.0
    %v1139 = vmul.f32 %v1121, %v1137
    %1141 = vrot.lane.b32.xlu0 %v1139, 64
    %v1142 = vpop.permute.xlu0 %1141
    %v1144 = vadd.f32 %v1138, %v1142
    %v1145 = vtanh.pop %v1144
    %v1146 = vmul.f32 %v1136, %v1145
    %v1147 = vsel %vm38, %v1036, %v1051
    %v1148 = vsel %vm39, %v1077, %v1092
    %1150 = vrot.lane.b32.xlu0 %v1146, 64
    %v1151 = vpop.permute.xlu0 %1150
    %v1152 = vsel %vm245, %v1151, 0
    %1154 = vmatpush.msra.mxu0 0.0
    %1155 = vmatpush.msra.mxu0 0.0
    %1156 = vmatpush.msra.mxu0 0.0
    %1157 = vmatpush.msra.mxu0 0.0
    %1158 = vmatpush.msra.mxu0 0.0
    %1159 = vmatpush.msra.mxu0 0.0
    %1160 = vmatpush.msra.mxu0 0.0
    %1161 = vmatpush.msra.mxu0 0.0
    %1162 = vmatpush.msra.mxu0 %v974
    %1163 = vmatpush.msra.mxu0 %v972
    %1164 = vmatpush.msra.mxu0 %v970
    %1165 = vmatpush.msra.mxu0 %v968
    %1166 = vmatpush.msra.mxu0 %v966
    %1167 = vmatpush.msra.mxu0 %v964
    %1168 = vmatpush.msra.mxu0 %v962
    %1169 = vmatpush.msra.mxu0 %v960
    %1170 = vmatmul.f32.gmra.mxu0 %v1152
    %v1171 = vpop.f32.mrf.mxu0
    %v1172 = vadd.f32 0.0, %v1171
    %1173 = vdwg.mxu0
    %1174 = vmatpush.msra.mxu0 0.0
    %1175 = vmatpush.msra.mxu0 0.0
    %1176 = vmatpush.msra.mxu0 0.0
    %1177 = vmatpush.msra.mxu0 0.0
    %1178 = vmatpush.msra.mxu0 0.0
    %1179 = vmatpush.msra.mxu0 0.0
    %1180 = vmatpush.msra.mxu0 0.0
    %1181 = vmatpush.msra.mxu0 0.0
    %1182 = vmatpush.msra.mxu0 %v975
    %1183 = vmatpush.msra.mxu0 %v973
    %1184 = vmatpush.msra.mxu0 %v971
    %1185 = vmatpush.msra.mxu0 %v969
    %1186 = vmatpush.msra.mxu0 %v967
    %1187 = vmatpush.msra.mxu0 %v965
    %1188 = vmatpush.msra.mxu0 %v963
    %1189 = vmatpush.msra.mxu0 %v961
    %1190 = vmatmul.f32.gmra.mxu0 %v1152
    %v1191 = vpop.f32.mrf.mxu0
    %v1192 = vadd.f32 0.0, %v1191
    %1193 = vdwg.mxu0
    %v1194 = vadd.f32 %v1147, %v1172
    %v1195 = vadd.f32 %v1148, %v1192
    %v1196 = vxor.u32 %v1194, 2147483648
    %v1197 = vxor.u32 %v1195, 2147483648
    %v1198 = vmul.f32 %v1196, 1.442695
    %v1199 = vpow.pop %v1198
    %v1200 = vmul.f32 %v1197, 1.442695
    %v1201 = vpow.pop %v1200
    %v1202 = vadd.f32 %v1199, 1.0
    %v1203 = vadd.f32 %v1201, 1.0
    %v1204 = vrcp.pop %v1202
    %v1205 = vmul.f32 %v1202, %v1204
    %v1206 = vsub.f32 1.0, %v1205
    %v1207 = vmul.f32 %v1204, %v1206
    %v1208 = vadd.f32 %v1204, %v1207
    %vm1209 = vweird.f32 %v1202
    %vm1210 = vweird.f32 %v1204
    %vm1211 = vmor %vm1209, %vm1210
    %v1212 = vsel %vm1211, %v1204, %v1208
    %v1213 = vand.u32 2147483647, %v1202
    %vm1214 = vcmp.eq.f32.partialorder %v1213, 8.507059e+37
    %v1215 = vand.u32 %v1202, 2147483648
    %v1216 = vor.u32 1.1754944e-38, %v1215
    %v1217 = vsel %vm1214, %v1216, %v1212
    %v1218 = vmul.f32 1.0, %v1217
    %v1219 = vrcp.pop %v1203
    %v1220 = vmul.f32 %v1203, %v1219
    %v1221 = vsub.f32 1.0, %v1220
    %v1222 = vmul.f32 %v1219, %v1221
    %v1223 = vadd.f32 %v1219, %v1222
    %vm1224 = vweird.f32 %v1203
    %vm1225 = vweird.f32 %v1219
    %vm1226 = vmor %vm1224, %vm1225
    %v1227 = vsel %vm1226, %v1219, %v1223
    %v1228 = vand.u32 2147483647, %v1203
    %vm1229 = vcmp.eq.f32.partialorder %v1228, 8.507059e+37
    %v1230 = vand.u32 %v1203, 2147483648
    %v1231 = vor.u32 1.1754944e-38, %v1230
    %v1232 = vsel %vm1229, %v1231, %v1227
    %v1233 = vmul.f32 1.0, %v1232
    %v1234 = vtanh.pop %v1195
    %v1235 = vmul.f32 %v1218, %v1144
    %v1236 = vmul.f32 %v1218, %v1234
    %1238 = vrot.lane.b32.xlu0 %v1236, 64
    %v1239 = vpop.permute.xlu0 %1238
    %v1241 = vadd.f32 %v1235, %v1239
    %v1242 = vtanh.pop %v1241
    %v1243 = vmul.f32 %v1233, %v1242
    %v1244 = vsel %vm38, %v1039, %v1048
    %v1245 = vsel %vm39, %v1080, %v1089
    %1247 = vrot.lane.b32.xlu0 %v1243, 64
    %v1248 = vpop.permute.xlu0 %1247
    %v1249 = vsel %vm245, %v1248, 0
    %1251 = vmatpush.msra.mxu0 0.0
    %1252 = vmatpush.msra.mxu0 0.0
    %1253 = vmatpush.msra.mxu0 0.0
    %1254 = vmatpush.msra.mxu0 0.0
    %1255 = vmatpush.msra.mxu0 0.0
    %1256 = vmatpush.msra.mxu0 0.0
    %1257 = vmatpush.msra.mxu0 0.0
    %1258 = vmatpush.msra.mxu0 0.0
    %1259 = vmatpush.msra.mxu0 %v974
    %1260 = vmatpush.msra.mxu0 %v972
    %1261 = vmatpush.msra.mxu0 %v970
    %1262 = vmatpush.msra.mxu0 %v968
    %1263 = vmatpush.msra.mxu0 %v966
    %1264 = vmatpush.msra.mxu0 %v964
    %1265 = vmatpush.msra.mxu0 %v962
    %1266 = vmatpush.msra.mxu0 %v960
    %1267 = vmatmul.f32.gmra.mxu0 %v1249
    %v1268 = vpop.f32.mrf.mxu0
    %v1269 = vadd.f32 0.0, %v1268
    %1270 = vdwg.mxu0
    %1271 = vmatpush.msra.mxu0 0.0
    %1272 = vmatpush.msra.mxu0 0.0
    %1273 = vmatpush.msra.mxu0 0.0
    %1274 = vmatpush.msra.mxu0 0.0
    %1275 = vmatpush.msra.mxu0 0.0
    %1276 = vmatpush.msra.mxu0 0.0
    %1277 = vmatpush.msra.mxu0 0.0
    %1278 = vmatpush.msra.mxu0 0.0
    %1279 = vmatpush.msra.mxu0 %v975
    %1280 = vmatpush.msra.mxu0 %v973
    %1281 = vmatpush.msra.mxu0 %v971
    %1282 = vmatpush.msra.mxu0 %v969
    %1283 = vmatpush.msra.mxu0 %v967
    %1284 = vmatpush.msra.mxu0 %v965
    %1285 = vmatpush.msra.mxu0 %v963
    %1286 = vmatpush.msra.mxu0 %v961
    %1287 = vmatmul.f32.gmra.mxu0 %v1249
    %v1288 = vpop.f32.mrf.mxu0
    %v1289 = vadd.f32 0.0, %v1288
    %1290 = vdwg.mxu0
    %v1291 = vadd.f32 %v1244, %v1269
    %v1292 = vadd.f32 %v1245, %v1289
    %v1293 = vxor.u32 %v1291, 2147483648
    %v1294 = vxor.u32 %v1292, 2147483648
    %v1295 = vmul.f32 %v1293, 1.442695
    %v1296 = vpow.pop %v1295
    %v1297 = vmul.f32 %v1294, 1.442695
    %v1298 = vpow.pop %v1297
    %v1299 = vadd.f32 %v1296, 1.0
    %v1300 = vadd.f32 %v1298, 1.0
    %v1301 = vrcp.pop %v1299
    %v1302 = vmul.f32 %v1299, %v1301
    %v1303 = vsub.f32 1.0, %v1302
    %v1304 = vmul.f32 %v1301, %v1303
    %v1305 = vadd.f32 %v1301, %v1304
    %vm1306 = vweird.f32 %v1299
    %vm1307 = vweird.f32 %v1301
    %vm1308 = vmor %vm1306, %vm1307
    %v1309 = vsel %vm1308, %v1301, %v1305
    %v1310 = vand.u32 2147483647, %v1299
    %vm1311 = vcmp.eq.f32.partialorder %v1310, 8.507059e+37
    %v1312 = vand.u32 %v1299, 2147483648
    %v1313 = vor.u32 1.1754944e-38, %v1312
    %v1314 = vsel %vm1311, %v1313, %v1309
    %v1315 = vmul.f32 1.0, %v1314
    %v1316 = vrcp.pop %v1300
    %v1317 = vmul.f32 %v1300, %v1316
    %v1318 = vsub.f32 1.0, %v1317
    %v1319 = vmul.f32 %v1316, %v1318
    %v1320 = vadd.f32 %v1316, %v1319
    %vm1321 = vweird.f32 %v1300
    %vm1322 = vweird.f32 %v1316
    %vm1323 = vmor %vm1321, %vm1322
    %v1324 = vsel %vm1323, %v1316, %v1320
    %v1325 = vand.u32 2147483647, %v1300
    %vm1326 = vcmp.eq.f32.partialorder %v1325, 8.507059e+37
    %v1327 = vand.u32 %v1300, 2147483648
    %v1328 = vor.u32 1.1754944e-38, %v1327
    %v1329 = vsel %vm1326, %v1328, %v1324
    %v1330 = vmul.f32 1.0, %v1329
    %v1331 = vtanh.pop %v1292
    %v1332 = vmul.f32 %v1315, %v1241
    %v1333 = vmul.f32 %v1315, %v1331
    %1335 = vrot.lane.b32.xlu0 %v1333, 64
    %v1336 = vpop.permute.xlu0 %1335
    %v1338 = vadd.f32 %v1332, %v1336
    %v1339 = vtanh.pop %v1338
    %v1340 = vmul.f32 %v1330, %v1339
    %v1341 = vsel %vm38, %v1042, %v1045
    %v1342 = vsel %vm39, %v1083, %v1086
    %1344 = vrot.lane.b32.xlu0 %v1340, 64
    %v1345 = vpop.permute.xlu0 %1344
    %v1346 = vsel %vm245, %v1345, 0
    %1348 = vmatpush.msra.mxu0 0.0
    %1349 = vmatpush.msra.mxu0 0.0
    %1350 = vmatpush.msra.mxu0 0.0
    %1351 = vmatpush.msra.mxu0 0.0
    %1352 = vmatpush.msra.mxu0 0.0
    %1353 = vmatpush.msra.mxu0 0.0
    %1354 = vmatpush.msra.mxu0 0.0
    %1355 = vmatpush.msra.mxu0 0.0
    %1356 = vmatpush.msra.mxu0 %v974
    %1357 = vmatpush.msra.mxu0 %v972
    %1358 = vmatpush.msra.mxu0 %v970
    %1359 = vmatpush.msra.mxu0 %v968
    %1360 = vmatpush.msra.mxu0 %v966
    %1361 = vmatpush.msra.mxu0 %v964
    %1362 = vmatpush.msra.mxu0 %v962
    %1363 = vmatpush.msra.mxu0 %v960
    %1364 = vmatmul.f32.gmra.mxu0 %v1346
    %v1365 = vpop.f32.mrf.mxu0
    %v1366 = vadd.f32 0.0, %v1365
    %1367 = vdwg.mxu0
    %1368 = vmatpush.msra.mxu0 0.0
    %1369 = vmatpush.msra.mxu0 0.0
    %1370 = vmatpush.msra.mxu0 0.0
    %1371 = vmatpush.msra.mxu0 0.0
    %1372 = vmatpush.msra.mxu0 0.0
    %1373 = vmatpush.msra.mxu0 0.0
    %1374 = vmatpush.msra.mxu0 0.0
    %1375 = vmatpush.msra.mxu0 0.0
    %1376 = vmatpush.msra.mxu0 %v975
    %1377 = vmatpush.msra.mxu0 %v973
    %1378 = vmatpush.msra.mxu0 %v971
    %1379 = vmatpush.msra.mxu0 %v969
    %1380 = vmatpush.msra.mxu0 %v967
    %1381 = vmatpush.msra.mxu0 %v965
    %1382 = vmatpush.msra.mxu0 %v963
    %1383 = vmatpush.msra.mxu0 %v961
    %1384 = vmatmul.f32.gmra.mxu0 %v1346
    %v1385 = vpop.f32.mrf.mxu0
    %v1386 = vadd.f32 0.0, %v1385
    %1387 = vdwg.mxu0
    %v1388 = vadd.f32 %v1341, %v1366
    %v1389 = vadd.f32 %v1342, %v1386
    %v1390 = vxor.u32 %v1388, 2147483648
    %v1391 = vxor.u32 %v1389, 2147483648
    %v1392 = vmul.f32 %v1390, 1.442695
    %v1393 = vpow.pop %v1392
    %v1394 = vmul.f32 %v1391, 1.442695
    %v1395 = vpow.pop %v1394
    %v1396 = vadd.f32 %v1393, 1.0
    %v1397 = vadd.f32 %v1395, 1.0
    %v1398 = vrcp.pop %v1396
    %v1399 = vmul.f32 %v1396, %v1398
    %v1400 = vsub.f32 1.0, %v1399
    %v1401 = vmul.f32 %v1398, %v1400
    %v1402 = vadd.f32 %v1398, %v1401
    %vm1403 = vweird.f32 %v1396
    %vm1404 = vweird.f32 %v1398
    %vm1405 = vmor %vm1403, %vm1404
    %v1406 = vsel %vm1405, %v1398, %v1402
    %v1407 = vand.u32 2147483647, %v1396
    %vm1408 = vcmp.eq.f32.partialorder %v1407, 8.507059e+37
    %v1409 = vand.u32 %v1396, 2147483648
    %v1410 = vor.u32 1.1754944e-38, %v1409
    %v1411 = vsel %vm1408, %v1410, %v1406
    %v1412 = vmul.f32 1.0, %v1411
    %v1413 = vrcp.pop %v1397
    %v1414 = vmul.f32 %v1397, %v1413
    %v1415 = vsub.f32 1.0, %v1414
    %v1416 = vmul.f32 %v1413, %v1415
    %v1417 = vadd.f32 %v1413, %v1416
    %vm1418 = vweird.f32 %v1397
    %vm1419 = vweird.f32 %v1413
    %vm1420 = vmor %vm1418, %vm1419
    %v1421 = vsel %vm1420, %v1413, %v1417
    %v1422 = vand.u32 2147483647, %v1397
    %vm1423 = vcmp.eq.f32.partialorder %v1422, 8.507059e+37
    %v1424 = vand.u32 %v1397, 2147483648
    %v1425 = vor.u32 1.1754944e-38, %v1424
    %v1426 = vsel %vm1423, %v1425, %v1421
    %v1427 = vmul.f32 1.0, %v1426
    %v1428 = vtanh.pop %v1389
    %v1429 = vmul.f32 %v1412, %v1338
    %v1430 = vmul.f32 %v1412, %v1428
    %1432 = vrot.lane.b32.xlu0 %v1430, 64
    %v1433 = vpop.permute.xlu0 %1432
    %v1435 = vadd.f32 %v1429, %v1433
    %v1436 = vtanh.pop %v1435
    %v1437 = vmul.f32 %v1427, %v1436
    %v1438 = vsel %vm38, %v1045, %v1042
    %v1439 = vsel %vm39, %v1086, %v1083
    %1441 = vrot.lane.b32.xlu0 %v1437, 64
    %v1442 = vpop.permute.xlu0 %1441
    %v1443 = vsel %vm245, %v1442, 0
    %1445 = vmatpush.msra.mxu0 0.0
    %1446 = vmatpush.msra.mxu0 0.0
    %1447 = vmatpush.msra.mxu0 0.0
    %1448 = vmatpush.msra.mxu0 0.0
    %1449 = vmatpush.msra.mxu0 0.0
    %1450 = vmatpush.msra.mxu0 0.0
    %1451 = vmatpush.msra.mxu0 0.0
    %1452 = vmatpush.msra.mxu0 0.0
    %1453 = vmatpush.msra.mxu0 %v974
    %1454 = vmatpush.msra.mxu0 %v972
    %1455 = vmatpush.msra.mxu0 %v970
    %1456 = vmatpush.msra.mxu0 %v968
    %1457 = vmatpush.msra.mxu0 %v966
    %1458 = vmatpush.msra.mxu0 %v964
    %1459 = vmatpush.msra.mxu0 %v962
    %1460 = vmatpush.msra.mxu0 %v960
    %1461 = vmatmul.f32.gmra.mxu0 %v1443
    %v1462 = vpop.f32.mrf.mxu0
    %v1463 = vadd.f32 0.0, %v1462
    %1464 = vdwg.mxu0
    %1465 = vmatpush.msra.mxu0 0.0
    %1466 = vmatpush.msra.mxu0 0.0
    %1467 = vmatpush.msra.mxu0 0.0
    %1468 = vmatpush.msra.mxu0 0.0
    %1469 = vmatpush.msra.mxu0 0.0
    %1470 = vmatpush.msra.mxu0 0.0
    %1471 = vmatpush.msra.mxu0 0.0
    %1472 = vmatpush.msra.mxu0 0.0
    %1473 = vmatpush.msra.mxu0 %v975
    %1474 = vmatpush.msra.mxu0 %v973
    %1475 = vmatpush.msra.mxu0 %v971
    %1476 = vmatpush.msra.mxu0 %v969
    %1477 = vmatpush.msra.mxu0 %v967
    %1478 = vmatpush.msra.mxu0 %v965
    %1479 = vmatpush.msra.mxu0 %v963
    %1480 = vmatpush.msra.mxu0 %v961
    %1481 = vmatmul.f32.gmra.mxu0 %v1443
    %v1482 = vpop.f32.mrf.mxu0
    %v1483 = vadd.f32 0.0, %v1482
    %1484 = vdwg.mxu0
    %v1485 = vadd.f32 %v1438, %v1463
    %v1486 = vadd.f32 %v1439, %v1483
    %v1487 = vxor.u32 %v1485, 2147483648
    %v1488 = vxor.u32 %v1486, 2147483648
    %v1489 = vmul.f32 %v1487, 1.442695
    %v1490 = vpow.pop %v1489
    %v1491 = vmul.f32 %v1488, 1.442695
    %v1492 = vpow.pop %v1491
    %v1493 = vadd.f32 %v1490, 1.0
    %v1494 = vadd.f32 %v1492, 1.0
    %v1495 = vrcp.pop %v1493
    %v1496 = vmul.f32 %v1493, %v1495
    %v1497 = vsub.f32 1.0, %v1496
    %v1498 = vmul.f32 %v1495, %v1497
    %v1499 = vadd.f32 %v1495, %v1498
    %vm1500 = vweird.f32 %v1493
    %vm1501 = vweird.f32 %v1495
    %vm1502 = vmor %vm1500, %vm1501
    %v1503 = vsel %vm1502, %v1495, %v1499
    %v1504 = vand.u32 2147483647, %v1493
    %vm1505 = vcmp.eq.f32.partialorder %v1504, 8.507059e+37
    %v1506 = vand.u32 %v1493, 2147483648
    %v1507 = vor.u32 1.1754944e-38, %v1506
    %v1508 = vsel %vm1505, %v1507, %v1503
    %v1509 = vmul.f32 1.0, %v1508
    %v1510 = vrcp.pop %v1494
    %v1511 = vmul.f32 %v1494, %v1510
    %v1512 = vsub.f32 1.0, %v1511
    %v1513 = vmul.f32 %v1510, %v1512
    %v1514 = vadd.f32 %v1510, %v1513
    %vm1515 = vweird.f32 %v1494
    %vm1516 = vweird.f32 %v1510
    %vm1517 = vmor %vm1515, %vm1516
    %v1518 = vsel %vm1517, %v1510, %v1514
    %v1519 = vand.u32 2147483647, %v1494
    %vm1520 = vcmp.eq.f32.partialorder %v1519, 8.507059e+37
    %v1521 = vand.u32 %v1494, 2147483648
    %v1522 = vor.u32 1.1754944e-38, %v1521
    %v1523 = vsel %vm1520, %v1522, %v1518
    %v1524 = vmul.f32 1.0, %v1523
    %v1525 = vtanh.pop %v1486
    %v1526 = vmul.f32 %v1509, %v1435
    %v1527 = vmul.f32 %v1509, %v1525
    %1529 = vrot.lane.b32.xlu0 %v1527, 64
    %v1530 = vpop.permute.xlu0 %1529
    %v1532 = vadd.f32 %v1526, %v1530
    %v1533 = vtanh.pop %v1532
    %v1534 = vmul.f32 %v1524, %v1533
    %v1535 = vsel %vm38, %v1048, %v1039
    %v1536 = vsel %vm39, %v1089, %v1080
    %1538 = vrot.lane.b32.xlu0 %v1534, 64
    %v1539 = vpop.permute.xlu0 %1538
    %v1540 = vsel %vm245, %v1539, 0
    %1542 = vmatpush.msra.mxu0 0.0
    %1543 = vmatpush.msra.mxu0 0.0
    %1544 = vmatpush.msra.mxu0 0.0
    %1545 = vmatpush.msra.mxu0 0.0
    %1546 = vmatpush.msra.mxu0 0.0
    %1547 = vmatpush.msra.mxu0 0.0
    %1548 = vmatpush.msra.mxu0 0.0
    %1549 = vmatpush.msra.mxu0 0.0
    %1550 = vmatpush.msra.mxu0 %v974
    %1551 = vmatpush.msra.mxu0 %v972
    %1552 = vmatpush.msra.mxu0 %v970
    %1553 = vmatpush.msra.mxu0 %v968
    %1554 = vmatpush.msra.mxu0 %v966
    %1555 = vmatpush.msra.mxu0 %v964
    %1556 = vmatpush.msra.mxu0 %v962
    %1557 = vmatpush.msra.mxu0 %v960
    %1558 = vmatmul.f32.gmra.mxu0 %v1540
    %v1559 = vpop.f32.mrf.mxu0
    %v1560 = vadd.f32 0.0, %v1559
    %1561 = vdwg.mxu0
    %1562 = vmatpush.msra.mxu0 0.0
    %1563 = vmatpush.msra.mxu0 0.0
    %1564 = vmatpush.msra.mxu0 0.0
    %1565 = vmatpush.msra.mxu0 0.0
    %1566 = vmatpush.msra.mxu0 0.0
    %1567 = vmatpush.msra.mxu0 0.0
    %1568 = vmatpush.msra.mxu0 0.0
    %1569 = vmatpush.msra.mxu0 0.0
    %1570 = vmatpush.msra.mxu0 %v975
    %1571 = vmatpush.msra.mxu0 %v973
    %1572 = vmatpush.msra.mxu0 %v971
    %1573 = vmatpush.msra.mxu0 %v969
    %1574 = vmatpush.msra.mxu0 %v967
    %1575 = vmatpush.msra.mxu0 %v965
    %1576 = vmatpush.msra.mxu0 %v963
    %1577 = vmatpush.msra.mxu0 %v961
    %1578 = vmatmul.f32.gmra.mxu0 %v1540
    %v1579 = vpop.f32.mrf.mxu0
    %v1580 = vadd.f32 0.0, %v1579
    %1581 = vdwg.mxu0
    %v1582 = vadd.f32 %v1535, %v1560
    %v1583 = vadd.f32 %v1536, %v1580
    %v1584 = vxor.u32 %v1582, 2147483648
    %v1585 = vxor.u32 %v1583, 2147483648
    %v1586 = vmul.f32 %v1584, 1.442695
    %v1587 = vpow.pop %v1586
    %v1588 = vmul.f32 %v1585, 1.442695
    %v1589 = vpow.pop %v1588
    %v1590 = vadd.f32 %v1587, 1.0
    %v1591 = vadd.f32 %v1589, 1.0
    %v1592 = vrcp.pop %v1590
    %v1593 = vmul.f32 %v1590, %v1592
    %v1594 = vsub.f32 1.0, %v1593
    %v1595 = vmul.f32 %v1592, %v1594
    %v1596 = vadd.f32 %v1592, %v1595
    %vm1597 = vweird.f32 %v1590
    %vm1598 = vweird.f32 %v1592
    %vm1599 = vmor %vm1597, %vm1598
    %v1600 = vsel %vm1599, %v1592, %v1596
    %v1601 = vand.u32 2147483647, %v1590
    %vm1602 = vcmp.eq.f32.partialorder %v1601, 8.507059e+37
    %v1603 = vand.u32 %v1590, 2147483648
    %v1604 = vor.u32 1.1754944e-38, %v1603
    %v1605 = vsel %vm1602, %v1604, %v1600
    %v1606 = vmul.f32 1.0, %v1605
    %v1607 = vrcp.pop %v1591
    %v1608 = vmul.f32 %v1591, %v1607
    %v1609 = vsub.f32 1.0, %v1608
    %v1610 = vmul.f32 %v1607, %v1609
    %v1611 = vadd.f32 %v1607, %v1610
    %vm1612 = vweird.f32 %v1591
    %vm1613 = vweird.f32 %v1607
    %vm1614 = vmor %vm1612, %vm1613
    %v1615 = vsel %vm1614, %v1607, %v1611
    %v1616 = vand.u32 2147483647, %v1591
    %vm1617 = vcmp.eq.f32.partialorder %v1616, 8.507059e+37
    %v1618 = vand.u32 %v1591, 2147483648
    %v1619 = vor.u32 1.1754944e-38, %v1618
    %v1620 = vsel %vm1617, %v1619, %v1615
    %v1621 = vmul.f32 1.0, %v1620
    %v1622 = vtanh.pop %v1583
    %v1623 = vmul.f32 %v1606, %v1532
    %v1624 = vmul.f32 %v1606, %v1622
    %1626 = vrot.lane.b32.xlu0 %v1624, 64
    %v1627 = vpop.permute.xlu0 %1626
    %v1629 = vadd.f32 %v1623, %v1627
    %v1630 = vtanh.pop %v1629
    %v1631 = vmul.f32 %v1621, %v1630
    %v1632 = vsel %vm38, %v1051, %v1036
    %v1633 = vsel %vm39, %v1092, %v1077
    %1635 = vrot.lane.b32.xlu0 %v1631, 64
    %v1636 = vpop.permute.xlu0 %1635
    %v1637 = vsel %vm245, %v1636, 0
    %1639 = vmatpush.msra.mxu0 0.0
    %1640 = vmatpush.msra.mxu0 0.0
    %1641 = vmatpush.msra.mxu0 0.0
    %1642 = vmatpush.msra.mxu0 0.0
    %1643 = vmatpush.msra.mxu0 0.0
    %1644 = vmatpush.msra.mxu0 0.0
    %1645 = vmatpush.msra.mxu0 0.0
    %1646 = vmatpush.msra.mxu0 0.0
    %1647 = vmatpush.msra.mxu0 %v974
    %1648 = vmatpush.msra.mxu0 %v972
    %1649 = vmatpush.msra.mxu0 %v970
    %1650 = vmatpush.msra.mxu0 %v968
    %1651 = vmatpush.msra.mxu0 %v966
    %1652 = vmatpush.msra.mxu0 %v964
    %1653 = vmatpush.msra.mxu0 %v962
    %1654 = vmatpush.msra.mxu0 %v960
    %1655 = vmatmul.f32.gmra.mxu0 %v1637
    %v1656 = vpop.f32.mrf.mxu0
    %v1657 = vadd.f32 0.0, %v1656
    %1658 = vdwg.mxu0
    %1659 = vmatpush.msra.mxu0 0.0
    %1660 = vmatpush.msra.mxu0 0.0
    %1661 = vmatpush.msra.mxu0 0.0
    %1662 = vmatpush.msra.mxu0 0.0
    %1663 = vmatpush.msra.mxu0 0.0
    %1664 = vmatpush.msra.mxu0 0.0
    %1665 = vmatpush.msra.mxu0 0.0
    %1666 = vmatpush.msra.mxu0 0.0
    %1667 = vmatpush.msra.mxu0 %v975
    %1668 = vmatpush.msra.mxu0 %v973
    %1669 = vmatpush.msra.mxu0 %v971
    %1670 = vmatpush.msra.mxu0 %v969
    %1671 = vmatpush.msra.mxu0 %v967
    %1672 = vmatpush.msra.mxu0 %v965
    %1673 = vmatpush.msra.mxu0 %v963
    %1674 = vmatpush.msra.mxu0 %v961
    %1675 = vmatmul.f32.gmra.mxu0 %v1637
    %v1676 = vpop.f32.mrf.mxu0
    %v1677 = vadd.f32 0.0, %v1676
    %1678 = vdwg.mxu0
    %v1679 = vadd.f32 %v1632, %v1657
    %v1680 = vadd.f32 %v1633, %v1677
    %v1681 = vxor.u32 %v1679, 2147483648
    %v1682 = vxor.u32 %v1680, 2147483648
    %v1683 = vmul.f32 %v1681, 1.442695
    %v1684 = vpow.pop %v1683
    %v1685 = vmul.f32 %v1682, 1.442695
    %v1686 = vpow.pop %v1685
    %v1687 = vadd.f32 %v1684, 1.0
    %v1688 = vadd.f32 %v1686, 1.0
    %v1689 = vrcp.pop %v1687
    %v1690 = vmul.f32 %v1687, %v1689
    %v1691 = vsub.f32 1.0, %v1690
    %v1692 = vmul.f32 %v1689, %v1691
    %v1693 = vadd.f32 %v1689, %v1692
    %vm1694 = vweird.f32 %v1687
    %vm1695 = vweird.f32 %v1689
    %vm1696 = vmor %vm1694, %vm1695
    %v1697 = vsel %vm1696, %v1689, %v1693
    %v1698 = vand.u32 2147483647, %v1687
    %vm1699 = vcmp.eq.f32.partialorder %v1698, 8.507059e+37
    %v1700 = vand.u32 %v1687, 2147483648
    %v1701 = vor.u32 1.1754944e-38, %v1700
    %v1702 = vsel %vm1699, %v1701, %v1697
    %v1703 = vmul.f32 1.0, %v1702
    %v1704 = vrcp.pop %v1688
    %v1705 = vmul.f32 %v1688, %v1704
    %v1706 = vsub.f32 1.0, %v1705
    %v1707 = vmul.f32 %v1704, %v1706
    %v1708 = vadd.f32 %v1704, %v1707
    %vm1709 = vweird.f32 %v1688
    %vm1710 = vweird.f32 %v1704
    %vm1711 = vmor %vm1709, %vm1710
    %v1712 = vsel %vm1711, %v1704, %v1708
    %v1713 = vand.u32 2147483647, %v1688
    %vm1714 = vcmp.eq.f32.partialorder %v1713, 8.507059e+37
    %v1715 = vand.u32 %v1688, 2147483648
    %v1716 = vor.u32 1.1754944e-38, %v1715
    %v1717 = vsel %vm1714, %v1716, %v1712
    %v1718 = vmul.f32 1.0, %v1717
    %v1719 = vtanh.pop %v1680
    %v1720 = vmul.f32 %v1703, %v1629
    %v1721 = vmul.f32 %v1703, %v1719
    %1723 = vrot.lane.b32.xlu0 %v1721, 64
    %v1724 = vpop.permute.xlu0 %1723
    %v1726 = vadd.f32 %v1720, %v1724
    %v1727 = vtanh.pop %v1726
    %v1728 = vmul.f32 %v1718, %v1727
    %v1729 = vsel %vm38, %v1054, %v1033
    %v1730 = vsel %vm39, %v1095, %v1074
    %1732 = vrot.lane.b32.xlu0 %v1728, 64
    %v1733 = vpop.permute.xlu0 %1732
    %v1734 = vsel %vm245, %v1733, 0
    %1736 = vmatpush.msra.mxu0 0.0
    %1737 = vmatpush.msra.mxu0 0.0
    %1738 = vmatpush.msra.mxu0 0.0
    %1739 = vmatpush.msra.mxu0 0.0
    %1740 = vmatpush.msra.mxu0 0.0
    %1741 = vmatpush.msra.mxu0 0.0
    %1742 = vmatpush.msra.mxu0 0.0
    %1743 = vmatpush.msra.mxu0 0.0
    %1744 = vmatpush.msra.mxu0 %v974
    %1745 = vmatpush.msra.mxu0 %v972
    %1746 = vmatpush.msra.mxu0 %v970
    %1747 = vmatpush.msra.mxu0 %v968
    %1748 = vmatpush.msra.mxu0 %v966
    %1749 = vmatpush.msra.mxu0 %v964
    %1750 = vmatpush.msra.mxu0 %v962
    %1751 = vmatpush.msra.mxu0 %v960
    %1752 = vmatmul.f32.gmra.mxu0 %v1734
    %v1753 = vpop.f32.mrf.mxu0
    %v1754 = vadd.f32 0.0, %v1753
    %1755 = vdwg.mxu0
    %1756 = vmatpush.msra.mxu0 0.0
    %1757 = vmatpush.msra.mxu0 0.0
    %1758 = vmatpush.msra.mxu0 0.0
    %1759 = vmatpush.msra.mxu0 0.0
    %1760 = vmatpush.msra.mxu0 0.0
    %1761 = vmatpush.msra.mxu0 0.0
    %1762 = vmatpush.msra.mxu0 0.0
    %1763 = vmatpush.msra.mxu0 0.0
    %1764 = vmatpush.msra.mxu0 %v975
    %1765 = vmatpush.msra.mxu0 %v973
    %1766 = vmatpush.msra.mxu0 %v971
    %1767 = vmatpush.msra.mxu0 %v969
    %1768 = vmatpush.msra.mxu0 %v967
    %1769 = vmatpush.msra.mxu0 %v965
    %1770 = vmatpush.msra.mxu0 %v963
    %1771 = vmatpush.msra.mxu0 %v961
    %1772 = vmatmul.f32.gmra.mxu0 %v1734
    %v1773 = vpop.f32.mrf.mxu0
    %v1774 = vadd.f32 0.0, %v1773
    %1775 = vdwg.mxu0
    %v1776 = vadd.f32 %v1729, %v1754
    %v1777 = vadd.f32 %v1730, %v1774
    %v1778 = vxor.u32 %v1776, 2147483648
    %v1779 = vxor.u32 %v1777, 2147483648
    %v1780 = vmul.f32 %v1778, 1.442695
    %v1781 = vpow.pop %v1780
    %v1782 = vmul.f32 %v1779, 1.442695
    %v1783 = vpow.pop %v1782
    %v1784 = vadd.f32 %v1781, 1.0
    %v1785 = vadd.f32 %v1783, 1.0
    %v1786 = vrcp.pop %v1784
    %v1787 = vmul.f32 %v1784, %v1786
    %v1788 = vsub.f32 1.0, %v1787
    %v1789 = vmul.f32 %v1786, %v1788
    %v1790 = vadd.f32 %v1786, %v1789
    %vm1791 = vweird.f32 %v1784
    %vm1792 = vweird.f32 %v1786
    %vm1793 = vmor %vm1791, %vm1792
    %v1794 = vsel %vm1793, %v1786, %v1790
    %v1795 = vand.u32 2147483647, %v1784
    %vm1796 = vcmp.eq.f32.partialorder %v1795, 8.507059e+37
    %v1797 = vand.u32 %v1784, 2147483648
    %v1798 = vor.u32 1.1754944e-38, %v1797
    %v1799 = vsel %vm1796, %v1798, %v1794
    %v1800 = vmul.f32 1.0, %v1799
    %v1801 = vrcp.pop %v1785
    %v1802 = vmul.f32 %v1785, %v1801
    %v1803 = vsub.f32 1.0, %v1802
    %v1804 = vmul.f32 %v1801, %v1803
    %v1805 = vadd.f32 %v1801, %v1804
    %vm1806 = vweird.f32 %v1785
    %vm1807 = vweird.f32 %v1801
    %vm1808 = vmor %vm1806, %vm1807
    %v1809 = vsel %vm1808, %v1801, %v1805
    %v1810 = vand.u32 2147483647, %v1785
    %vm1811 = vcmp.eq.f32.partialorder %v1810, 8.507059e+37
    %v1812 = vand.u32 %v1785, 2147483648
    %v1813 = vor.u32 1.1754944e-38, %v1812
    %v1814 = vsel %vm1811, %v1813, %v1809
    %v1815 = vmul.f32 1.0, %v1814
    %v1816 = vtanh.pop %v1777
    %v1817 = vmul.f32 %v1800, %v1726
    %v1818 = vmul.f32 %v1800, %v1816
    %1820 = vrot.lane.b32.xlu0 %v1818, 64
    %v1821 = vpop.permute.xlu0 %1820
    %v1823 = vadd.f32 %v1817, %v1821
    %v1824 = vtanh.pop %v1823
    %v1825 = vmul.f32 %v1815, %v1824
    %v1826 = vld [vmem:[%s1] sm:$0xff]
    %vm1827 = vcmp.ge.f32.partialorder %v1826, 0.0
    %v1828 = vmul.f32 %v1826, 0.1
    %v1829 = vsel %vm1827, %v1826, %v1828
    %v1830 = vld [vmem:[#allocation3] sm:$0xff]
    %v1831 = vld [vmem:[#allocation3 + $0x8] sm:$0xff]
    %v1832 = vld [vmem:[#allocation3 + $0x10] sm:$0xff]
    %v1833 = vld [vmem:[#allocation3 + $0x18] sm:$0x1]
    %v1834 = vperm.slane %v1833, 0
    %v1836 = vsel %vm78, %v1829, 0
    %1838 = vmatpush.msra.mxu0 0.0
    %1839 = vmatpush.msra.mxu0 0.0
    %1840 = vmatpush.msra.mxu0 0.0
    %1841 = vmatpush.msra.mxu0 0.0
    %1842 = vmatpush.msra.mxu0 0.0
    %1843 = vmatpush.msra.mxu0 0.0
    %1844 = vmatpush.msra.mxu0 0.0
    %1845 = vmatpush.msra.mxu0 0.0
    %1846 = vmatpush.msra.mxu0 0.0
    %1847 = vmatpush.msra.mxu0 0.0
    %1848 = vmatpush.msra.mxu0 0.0
    %1849 = vmatpush.msra.mxu0 0.0
    %1850 = vmatpush.msra.mxu0 0.0
    %1851 = vmatpush.msra.mxu0 %v1832
    %1852 = vmatpush.msra.mxu0 %v1831
    %1853 = vmatpush.msra.mxu0 %v1830
    %1854 = vmatmul.f32.gmra.mxu0 %v1836
    %v1855 = vpop.f32.mrf.mxu0
    %v1856 = vadd.f32 %v1834, %v1855
    %1857 = vdwg.mxu0
    %vm1858 = vcmp.ge.f32.partialorder %v1856, 0.0
    %v1859 = vmul.f32 %v1856, 0.1
    %v1860 = vsel %vm1858, %v1856, %v1859
    %v1861 = vld [vmem:[#allocation3 + $0x20] sm:$0xff]
    %v1862 = vld [vmem:[#allocation3 + $0x28] sm:$0xff]
    %v1863 = vld [vmem:[#allocation3 + $0x30] sm:$0xff]
    %v1864 = vld [vmem:[#allocation3 + $0x38] sm:$0x1]
    %v1865 = vperm.slane %v1864, 0
    %v1867 = vsel %vm78, %v1860, 0
    %1869 = vmatpush.msra.mxu0 0.0
    %1870 = vmatpush.msra.mxu0 0.0
    %1871 = vmatpush.msra.mxu0 0.0
    %1872 = vmatpush.msra.mxu0 0.0
    %1873 = vmatpush.msra.mxu0 0.0
    %1874 = vmatpush.msra.mxu0 0.0
    %1875 = vmatpush.msra.mxu0 0.0
    %1876 = vmatpush.msra.mxu0 0.0
    %1877 = vmatpush.msra.mxu0 0.0
    %1878 = vmatpush.msra.mxu0 0.0
    %1879 = vmatpush.msra.mxu0 0.0
    %1880 = vmatpush.msra.mxu0 0.0
    %1881 = vmatpush.msra.mxu0 0.0
    %1882 = vmatpush.msra.mxu0 %v1863
    %1883 = vmatpush.msra.mxu0 %v1862
    %1884 = vmatpush.msra.mxu0 %v1861
    %1885 = vmatmul.f32.gmra.mxu0 %v1867
    %v1886 = vpop.f32.mrf.mxu0
    %v1887 = vadd.f32 %v1865, %v1886
    %1888 = vdwg.mxu0
    %v1889 = vxor.u32 %v1887, 2147483648
    %v1890 = vmul.f32 %v1889, 1.442695
    %v1891 = vpow.pop %v1890
    %v1892 = vadd.f32 %v1891, 1.0
    %v1893 = vrcp.pop %v1892
    %v1894 = vmul.f32 %v1892, %v1893
    %v1895 = vsub.f32 1.0, %v1894
    %v1896 = vmul.f32 %v1893, %v1895
    %v1897 = vadd.f32 %v1893, %v1896
    %vm1898 = vweird.f32 %v1892
    %vm1899 = vweird.f32 %v1893
    %vm1900 = vmor %vm1898, %vm1899
    %v1901 = vsel %vm1900, %v1893, %v1897
    %v1902 = vand.u32 2147483647, %v1892
    %vm1903 = vcmp.eq.f32.partialorder %v1902, 8.507059e+37
    %v1904 = vand.u32 %v1892, 2147483648
    %v1905 = vor.u32 1.1754944e-38, %v1904
    %v1906 = vsel %vm1903, %v1905, %v1901
    %v1907 = vmul.f32 1.0, %v1906
    %1909 = vrot.lane.b32.xlu0 %v1825, 64
    %v1910 = vpop.permute.xlu0 %1909
    %v1913 = vsel %vm40, %v1910, %v1151
    %vm1914 = vcmp.ge.f32.partialorder %v1913, 0.0
    %v1915 = vmul.f32 %v1913, 0.1
    %v1916 = vsel %vm1914, %v1913, %v1915
    %v1917 = vld [vmem:[#allocation3 + $0x40] sm:$0xff]
    %v1918 = vld [vmem:[#allocation3 + $0x48] sm:$0xff]
    %v1919 = vld [vmem:[#allocation3 + $0x50] sm:$0xff]
    %v1920 = vld [vmem:[#allocation3 + $0x58] sm:$0xff]
    %v1921 = vld [vmem:[#allocation3 + $0x60] sm:$0xff]
    %v1922 = vld [vmem:[#allocation3 + $0x68] sm:$0xff]
    %v1923 = vld [vmem:[#allocation3 + $0x70] sm:$0xff]
    %v1924 = vld [vmem:[#allocation3 + $0x78] sm:$0xff]
    %v1925 = vld [vmem:[#allocation3 + $0x80] sm:$0x1]
    %v1926 = vperm.slane %v1925, 0
    %v1928 = vsel %vm245, %v1916, 0
    %1930 = vmatpush.msra.mxu0 0.0
    %1931 = vmatpush.msra.mxu0 0.0
    %1932 = vmatpush.msra.mxu0 0.0
    %1933 = vmatpush.msra.mxu0 0.0
    %1934 = vmatpush.msra.mxu0 0.0
    %1935 = vmatpush.msra.mxu0 0.0
    %1936 = vmatpush.msra.mxu0 0.0
    %1937 = vmatpush.msra.mxu0 0.0
    %1938 = vmatpush.msra.mxu0 %v1924
    %1939 = vmatpush.msra.mxu0 %v1923
    %1940 = vmatpush.msra.mxu0 %v1922
    %1941 = vmatpush.msra.mxu0 %v1921
    %1942 = vmatpush.msra.mxu0 %v1920
    %1943 = vmatpush.msra.mxu0 %v1919
    %1944 = vmatpush.msra.mxu0 %v1918
    %1945 = vmatpush.msra.mxu0 %v1917
    %1946 = vmatmul.f32.gmra.mxu0 %v1928
    %v1947 = vpop.f32.mrf.mxu0
    %v1948 = vadd.f32 %v1926, %v1947
    %1949 = vdwg.mxu0
    %v1950 = vld [vmem:[#allocation3 + $0x88] sm:$0x1]
    %v1951 = vxor.u32 %v1950, 2147483648
    %v1952 = vmul.f32 %v1951, 1.442695
    %v1953 = vpow.pop %v1952
    %v1954 = vadd.f32 %v1953, 1.0
    %v1955 = vrcp.pop %v1954
    %v1956 = vmul.f32 %v1954, %v1955
    %v1957 = vsub.f32 1.0, %v1956
    %v1958 = vmul.f32 %v1955, %v1957
    %v1959 = vadd.f32 %v1955, %v1958
    %vm1960 = vweird.f32 %v1954
    %vm1961 = vweird.f32 %v1955
    %vm1962 = vmor %vm1960, %vm1961
    %v1963 = vsel %vm1962, %v1955, %v1959
    %v1964 = vand.u32 2147483647, %v1954
    %vm1965 = vcmp.eq.f32.partialorder %v1964, 8.507059e+37
    %v1966 = vand.u32 %v1954, 2147483648
    %v1967 = vor.u32 1.1754944e-38, %v1966
    %v1968 = vsel %vm1965, %v1967, %v1963
    %v1969 = vmul.f32 1.0, %v1968
    %s1971 = vtos %v1969
    %v1972 = vstv %s1971
    %v1974 = vmul.f32 %v1972, %v1826
    %v1975 = vmul.f32 %v1974, %v1907
    %v1976 = vsub.f32 1.0, %v1969
    %s1978 = vtos %v1976
    %v1979 = vstv %s1978
    %v1981 = vmul.f32 %v1948, %v1979
    %v1982 = vadd.f32 %v1975, %v1981
    %1983 = vst.msk [vmem:[%s4] sm:$0xff] %vm78, %v1982
    // Predicated region
    $region22: #{_lambda_.1} parent=1 // pred_check
      _
    $region23: #{_lambda_.1} parent=1 // pred_check_branch
      %1985 = sbr.rel (0) target = $region25
    $region24: #{_lambda_.1} parent=1 // pred_region
      _
    $region25: #{_lambda_.1} parent=1 // pred_fallthru
      _
    // Predicated region
    $region26: #{_lambda_.1} parent=1 // pred_check
      _
    $region27: #{_lambda_.1} parent=1 // pred_check_branch
      %1987 = sbr.rel (0) target = $region29
    $region28: #{_lambda_.1} parent=1 // pred_region
      _
    $region29: #{_lambda_.1} parent=1 // pred_fallthru
      _
    %1988 = vsyncpa [#allocation4], 1

</llo_original>
